<compile_context>
chip_gen: v5e
topology: v5e:2x2
jax: 0.10.0
libtpu: 0.0.40
codegen_flags: <defaults>
</compile_context>

<pallas_src>
import math

import jax
import jax.numpy as jnp
from jax.experimental import pallas as pl
from jax.experimental.pallas import tpu as pltpu

# --- config (small shapes consistent with the module; defaults scaled down) ---
IN_FEATURES = 2          # module default in_features=2
OUT_FEATURES = 1         # module default out_features=1
HIDDEN = 64              # hidden_features (small for the demo; default was 256)
NUM_HIDDEN_LAYERS = 3    # module default num_hidden_layers=3
TILE_M_MAX = 1024        # v7x-safe row tile (64 MiB VMEM part); fine on v5e/v6e too

_H2 = 2 * HIDDEN         # fused (netA | netB) width = 128 -> fills the 128-lane vreg
_O2 = 2 * OUT_FEATURES   # fused output width (A cols | B cols)


def _round_up(x, m):
    return ((x + m - 1) // m) * m


def _fcblock_kernel(p_ref, c_ref, w0_ref, b0_ref, wh_ref, bh_ref, wL_ref, bL_ref,
                    out_ref):
    """One row-tile of the fused (netA|netB) MLP, entirely in VMEM."""
    c = 30.0 * (10.0 * p_ref[0])                  # Sine(30*x) applied to 10*params*linear(x)
    coords = c_ref[...]                           # (TILE_M, IN_FEATURES+1)
    t = coords[:, IN_FEATURES:IN_FEATURES + 1]    # (TILE_M, 1) -- coords[..., -1:]

    # First layer (K = IN_FEATURES = 2): rank-1 VPU updates, skip the MXU.
    h = b0_ref[...]                               # (1, 2H), broadcasts up
    for k in range(IN_FEATURES):
        h = h + coords[:, k:k + 1] * w0_ref[k:k + 1, :]
    h = jnp.sin(c * h)

    # Hidden layers: fused 128-wide block-diagonal matmuls on the MXU.
    for i in range(NUM_HIDDEN_LAYERS):
        z = jnp.dot(h, wh_ref[i], preferred_element_type=jnp.float32) + bh_ref[i]
        h = jnp.sin(c * z)

    # Outermost linear: (TILE_M, 2H) @ (2H, 2*out). Cols [:out] = A, [out:] = B.
    out = jnp.dot(h, wL_ref[...], preferred_element_type=jnp.float32) + bL_ref[...]

    # outputB = netB(...) - coords[..., -1:], applied to the B columns only.
    col = jax.lax.broadcasted_iota(jnp.int32, out.shape, 1)
    out_ref[...] = out - jnp.where(col >= OUT_FEATURES, t, 0.0)


def _pack_params(p):
    """Host-side one-time packing: pre-transpose to (in,out) and fuse netA/netB."""
    def blk_diag(a, b):
        za = jnp.zeros((a.shape[0], b.shape[1]), jnp.float32)
        zb = jnp.zeros((b.shape[0], a.shape[1]), jnp.float32)
        return jnp.concatenate(
            [jnp.concatenate([a, za], axis=1),
             jnp.concatenate([zb, b], axis=1)], axis=0)

    w0 = jnp.concatenate([p["A_w0"].T, p["B_w0"].T], axis=1)        # (in, 2H)
    b0 = jnp.concatenate([p["A_b0"], p["B_b0"]], axis=1)            # (1, 2H)
    wh = jnp.stack([blk_diag(p["A_wh"][i].T, p["B_wh"][i].T)
                    for i in range(NUM_HIDDEN_LAYERS)])             # (L, 2H, 2H)
    bh = jnp.stack([jnp.concatenate([p["A_bh"][i], p["B_bh"][i]], axis=1)
                    for i in range(NUM_HIDDEN_LAYERS)])             # (L, 1, 2H)
    wL = blk_diag(p["A_wL"].T, p["B_wL"].T)                         # (2H, 2*out)
    bL = jnp.concatenate([p["A_bL"], p["B_bL"]], axis=1)            # (1, 2*out)
    return w0, b0, wh, bh, wL, bL


def single_bvp_net_forward(coords, params):
    """JAX wrapper: flatten (B,N,D) -> (M,D), pad/tile rows, call the kernel."""
    # TODO(synk): autograd graph setup (clone().detach().requires_grad_) is a
    # training-time concern in the PyTorch module; this implements forward only.
    B, N, D = coords.shape
    assert D == IN_FEATURES + 1
    M = B * N
    flat = coords.reshape(M, D).astype(jnp.float32)

    tile_m = min(TILE_M_MAX, _round_up(M, 8))
    m_pad = _round_up(M, tile_m)
    if m_pad != M:
        flat = jnp.pad(flat, ((0, m_pad - M), (0, 0)))

    w0, b0, wh, bh, wL, bL = _pack_params(params)

    resident2 = lambda i: (0, 0)
    resident3 = lambda i: (0, 0, 0)

    cost = pl.CostEstimate(
        flops=2 * m_pad * (IN_FEATURES * _H2
                           + NUM_HIDDEN_LAYERS * _H2 * _H2
                           + _H2 * _O2),
        transcendentals=m_pad * _H2 * (NUM_HIDDEN_LAYERS + 1),
        bytes_accessed=4 * (m_pad * (D + _O2)
                            + IN_FEATURES * _H2 + _H2
                            + NUM_HIDDEN_LAYERS * (_H2 * _H2 + _H2)
                            + _H2 * _O2 + _O2),
    )

    out = pl.pallas_call(
        _fcblock_kernel,
        out_shape=jax.ShapeDtypeStruct((m_pad, _O2), jnp.float32),
        grid=(m_pad // tile_m,),
        in_specs=[
            pl.BlockSpec(memory_space=pltpu.MemorySpace.SMEM),        # FCBlock scalar param
            pl.BlockSpec((tile_m, D), lambda i: (i, 0)),              # coords row tile
            pl.BlockSpec((IN_FEATURES, _H2), resident2),              # fused W0 (pre-T)
            pl.BlockSpec((1, _H2), resident2),                        # fused b0
            pl.BlockSpec((NUM_HIDDEN_LAYERS, _H2, _H2), resident3),   # fused Wh (pre-T)
            pl.BlockSpec((NUM_HIDDEN_LAYERS, 1, _H2), resident3),     # fused bh
            pl.BlockSpec((_H2, _O2), resident2),                      # fused WL (pre-T)
            pl.BlockSpec((1, _O2), resident2),                        # fused bL
        ],
        out_specs=pl.BlockSpec((tile_m, _O2), lambda i: (i, 0)),
        compiler_params=pltpu.CompilerParams(
            dimension_semantics=("parallel",),          # megacore-shardable on v7x
            vmem_limit_bytes=32 * 1024 * 1024),
        cost_estimate=cost,
    )(params["params"], flat, w0, b0, wh, bh, wL, bL)

    out = out[:M]
    return {
        "model_in": coords,
        "model_outA": out[:, :OUT_FEATURES].reshape(B, N, OUT_FEATURES),
        "model_outB": out[:, OUT_FEATURES:].reshape(B, N, OUT_FEATURES),
    }


def init_params(key):
    """Deterministic init mirroring the module's sine_init / first_layer_sine_init
    and PyTorch's default nn.Linear bias init. Weights kept PyTorch-style
    (out_features, in_features); packing/transposition happens in the wrapper."""
    def first_layer_w(k, shape):           # first_layer_sine_init
        fan_in = shape[-1]
        lim = 1.0 / fan_in
        return jax.random.uniform(k, shape, jnp.float32, -lim, lim)

    def sine_w(k, shape):                  # sine_init
        fan_in = shape[-1]
        lim = math.sqrt(6.0 / fan_in) / 30.0
        return jax.random.uniform(k, shape, jnp.float32, -lim, lim)

    def default_b(k, shape, fan_in):       # nn.Linear default bias init
        lim = 1.0 / math.sqrt(fan_in)
        return jax.random.uniform(k, shape, jnp.float32, -lim, lim)

    keys = iter(jax.random.split(key, 32))
    p = {"params": jnp.array([0.1], dtype=jnp.float32)}   # FCBlock scalar param
    for net in ("A", "B"):
        p[f"{net}_w0"] = first_layer_w(next(keys), (HIDDEN, IN_FEATURES))
        p[f"{net}_b0"] = default_b(next(keys), (1, HIDDEN), IN_FEATURES)
        p[f"{net}_wh"] = jnp.stack(
            [sine_w(next(keys), (HIDDEN, HIDDEN)) for _ in range(NUM_HIDDEN_LAYERS)])
        p[f"{net}_bh"] = jnp.stack(
            [default_b(next(keys), (1, HIDDEN), HIDDEN) for _ in range(NUM_HIDDEN_LAYERS)])
        p[f"{net}_wL"] = sine_w(next(keys), (OUT_FEATURES, HIDDEN))
        p[f"{net}_bL"] = default_b(next(keys), (1, OUT_FEATURES), HIDDEN)
    return p


def _reference_forward(coords, params):
    """Pure-JAX reference of the same math, for a sanity check."""
    x = coords[:, :, :IN_FEATURES]
    t = coords[:, :, IN_FEATURES:]
    scale = 10.0 * params["params"][0]

    def run(net):
        h = jnp.sin(30.0 * scale * (x @ params[f"{net}_w0"].T + params[f"{net}_b0"]))
        for i in range(NUM_HIDDEN_LAYERS):
            h = jnp.sin(30.0 * scale * (h @ params[f"{net}_wh"][i].T + params[f"{net}_bh"][i]))
        return h @ params[f"{net}_wL"].T + params[f"{net}_bL"]

    return run("A"), run("B") - t


if __name__ == "__main__":
    key = jax.random.PRNGKey(0)
    pkey, ckey = jax.random.split(key)
    params = init_params(pkey)

    B, N = 2, 8                                    # batch=2, 8 query points
    coords = jax.random.normal(ckey, (B, N, IN_FEATURES + 1), dtype=jnp.float32)

    out = single_bvp_net_forward(coords, params)
    jax.block_until_ready(out)

    refA, refB = _reference_forward(coords, params)
    assert jnp.allclose(out["model_outA"], refA, atol=1e-3, rtol=1e-3)
    assert jnp.allclose(out["model_outB"], refB, atol=1e-3, rtol=1e-3)

    print("KERNEL_OK")
</pallas_src>

<mosaic_0001>
module attributes {stable_mosaic.version = 11 : i64} {
  func.func @_fcblock_kernel(%arg0: i32, %arg1: memref<1xf32, #tpu.memory_space<smem>>, %arg2: memref<16x3xf32, #tpu.memory_space<vmem>>, %arg3: memref<2x128xf32, #tpu.memory_space<vmem>>, %arg4: memref<1x128xf32, #tpu.memory_space<vmem>>, %arg5: memref<3x128x128xf32, #tpu.memory_space<vmem>>, %arg6: memref<3x1x128xf32, #tpu.memory_space<vmem>>, %arg7: memref<128x2xf32, #tpu.memory_space<vmem>>, %arg8: memref<1x2xf32, #tpu.memory_space<vmem>>, %arg9: memref<16x2xf32, #tpu.memory_space<vmem>>) attributes {dimension_semantics = [#tpu.dimension_semantics<parallel>], iteration_bounds = array<i64: 1>, scalar_prefetch = 0 : i64, scratch_operands = 0 : i64, tpu.core_type = #tpu.core_type<tc>, window_params = [{transform_indices = @transform_0, window_bounds = array<i64: 1>}, {transform_indices = @transform_1, window_bounds = array<i64: 16, 3>}, {pipeline_mode = #tpu.pipeline_mode<synchronous>, transform_indices = @transform_2, window_bounds = array<i64: 2, 128>}, {pipeline_mode = #tpu.pipeline_mode<synchronous>, transform_indices = @transform_3, window_bounds = array<i64: 1, 128>}, {pipeline_mode = #tpu.pipeline_mode<synchronous>, transform_indices = @transform_4, window_bounds = array<i64: 3, 128, 128>}, {pipeline_mode = #tpu.pipeline_mode<synchronous>, transform_indices = @transform_5, window_bounds = array<i64: 3, 1, 128>}, {pipeline_mode = #tpu.pipeline_mode<synchronous>, transform_indices = @transform_6, window_bounds = array<i64: 128, 2>}, {pipeline_mode = #tpu.pipeline_mode<synchronous>, transform_indices = @transform_7, window_bounds = array<i64: 1, 2>}, {transform_indices = @transform_8, window_bounds = array<i64: 16, 2>}]} {
    %c0 = arith.constant 0 : index
    %0 = memref.load %arg1[%c0] : memref<1xf32, #tpu.memory_space<smem>>
    %cst = arith.constant 1.000000e+01 : f32
    %1 = arith.mulf %cst, %0 : f32
    %cst_0 = arith.constant 3.000000e+01 : f32
    %2 = arith.mulf %cst_0, %1 : f32
    %c0_1 = arith.constant 0 : index
    %c0_2 = arith.constant 0 : index
    %3 = vector.load %arg2[%c0_1, %c0_2] : memref<16x3xf32, #tpu.memory_space<vmem>>, vector<16x3xf32>
    %4 = vector.extract_strided_slice %3 {offsets = [0, 2], sizes = [16, 1], strides = [1, 1]} : vector<16x3xf32> to vector<16x1xf32>
    %c0_3 = arith.constant 0 : index
    %c0_4 = arith.constant 0 : index
    %5 = vector.load %arg4[%c0_3, %c0_4] : memref<1x128xf32, #tpu.memory_space<vmem>>, vector<1x128xf32>
    %6 = vector.extract_strided_slice %3 {offsets = [0, 0], sizes = [16, 1], strides = [1, 1]} : vector<16x3xf32> to vector<16x1xf32>
    %c0_5 = arith.constant 0 : index
    %c0_6 = arith.constant 0 : index
    %7 = vector.load %arg3[%c0_5, %c0_6] : memref<2x128xf32, #tpu.memory_space<vmem>>, vector<1x128xf32>
    %8 = vector.broadcast %6 : vector<16x1xf32> to vector<16x128xf32>
    %9 = vector.broadcast %7 : vector<1x128xf32> to vector<16x128xf32>
    %10 = arith.mulf %8, %9 : vector<16x128xf32>
    %11 = vector.broadcast %5 : vector<1x128xf32> to vector<16x128xf32>
    %12 = arith.addf %11, %10 : vector<16x128xf32>
    %13 = vector.extract_strided_slice %3 {offsets = [0, 1], sizes = [16, 1], strides = [1, 1]} : vector<16x3xf32> to vector<16x1xf32>
    %c1 = arith.constant 1 : index
    %c0_7 = arith.constant 0 : index
    %14 = vector.load %arg3[%c1, %c0_7] : memref<2x128xf32, #tpu.memory_space<vmem>>, vector<1x128xf32>
    %15 = vector.broadcast %13 : vector<16x1xf32> to vector<16x128xf32>
    %16 = vector.broadcast %14 : vector<1x128xf32> to vector<16x128xf32>
    %17 = arith.mulf %15, %16 : vector<16x128xf32>
    %18 = arith.addf %12, %17 : vector<16x128xf32>
    %19 = vector.broadcast %2 : f32 to vector<16x128xf32>
    %20 = arith.mulf %19, %18 : vector<16x128xf32>
    %21 = math.sin %20 : vector<16x128xf32>
    %c0_8 = arith.constant 0 : index
    %c0_9 = arith.constant 0 : index
    %c0_10 = arith.constant 0 : index
    %22 = vector.load %arg5[%c0_8, %c0_9, %c0_10] : memref<3x128x128xf32, #tpu.memory_space<vmem>>, vector<1x128x128xf32>
    %23 = vector.shape_cast %22 : vector<1x128x128xf32> to vector<128x128xf32>
    %cst_11 = arith.constant dense<0.000000e+00> : vector<16x128xf32>
    %24 = tpu.matmul %21, %23, %cst_11 {dimension_numbers = #tpu.dot_dimension_numbers<[1], [0], [0], [1], [0, 0, 1, 1], [], []>} : vector<16x128xf32>, vector<128x128xf32>, vector<16x128xf32> -> vector<16x128xf32>
    %c0_12 = arith.constant 0 : index
    %c0_13 = arith.constant 0 : index
    %c0_14 = arith.constant 0 : index
    %25 = vector.load %arg6[%c0_12, %c0_13, %c0_14] : memref<3x1x128xf32, #tpu.memory_space<vmem>>, vector<1x1x128xf32>
    %26 = vector.shape_cast %25 : vector<1x1x128xf32> to vector<1x128xf32>
    %27 = vector.broadcast %26 : vector<1x128xf32> to vector<16x128xf32>
    %28 = arith.addf %24, %27 : vector<16x128xf32>
    %29 = vector.broadcast %2 : f32 to vector<16x128xf32>
    %30 = arith.mulf %29, %28 : vector<16x128xf32>
    %31 = math.sin %30 : vector<16x128xf32>
    %c1_15 = arith.constant 1 : index
    %c0_16 = arith.constant 0 : index
    %c0_17 = arith.constant 0 : index
    %32 = vector.load %arg5[%c1_15, %c0_16, %c0_17] : memref<3x128x128xf32, #tpu.memory_space<vmem>>, vector<1x128x128xf32>
    %33 = vector.shape_cast %32 : vector<1x128x128xf32> to vector<128x128xf32>
    %cst_18 = arith.constant dense<0.000000e+00> : vector<16x128xf32>
    %34 = tpu.matmul %31, %33, %cst_18 {dimension_numbers = #tpu.dot_dimension_numbers<[1], [0], [0], [1], [0, 0, 1, 1], [], []>} : vector<16x128xf32>, vector<128x128xf32>, vector<16x128xf32> -> vector<16x128xf32>
    %c1_19 = arith.constant 1 : index
    %c0_20 = arith.constant 0 : index
    %c0_21 = arith.constant 0 : index
    %35 = vector.load %arg6[%c1_19, %c0_20, %c0_21] : memref<3x1x128xf32, #tpu.memory_space<vmem>>, vector<1x1x128xf32>
    %36 = vector.shape_cast %35 : vector<1x1x128xf32> to vector<1x128xf32>
    %37 = vector.broadcast %36 : vector<1x128xf32> to vector<16x128xf32>
    %38 = arith.addf %34, %37 : vector<16x128xf32>
    %39 = vector.broadcast %2 : f32 to vector<16x128xf32>
    %40 = arith.mulf %39, %38 : vector<16x128xf32>
    %41 = math.sin %40 : vector<16x128xf32>
    %c2 = arith.constant 2 : index
    %c0_22 = arith.constant 0 : index
    %c0_23 = arith.constant 0 : index
    %42 = vector.load %arg5[%c2, %c0_22, %c0_23] : memref<3x128x128xf32, #tpu.memory_space<vmem>>, vector<1x128x128xf32>
    %43 = vector.shape_cast %42 : vector<1x128x128xf32> to vector<128x128xf32>
    %cst_24 = arith.constant dense<0.000000e+00> : vector<16x128xf32>
    %44 = tpu.matmul %41, %43, %cst_24 {dimension_numbers = #tpu.dot_dimension_numbers<[1], [0], [0], [1], [0, 0, 1, 1], [], []>} : vector<16x128xf32>, vector<128x128xf32>, vector<16x128xf32> -> vector<16x128xf32>
    %c2_25 = arith.constant 2 : index
    %c0_26 = arith.constant 0 : index
    %c0_27 = arith.constant 0 : index
    %45 = vector.load %arg6[%c2_25, %c0_26, %c0_27] : memref<3x1x128xf32, #tpu.memory_space<vmem>>, vector<1x1x128xf32>
    %46 = vector.shape_cast %45 : vector<1x1x128xf32> to vector<1x128xf32>
    %47 = vector.broadcast %46 : vector<1x128xf32> to vector<16x128xf32>
    %48 = arith.addf %44, %47 : vector<16x128xf32>
    %49 = vector.broadcast %2 : f32 to vector<16x128xf32>
    %50 = arith.mulf %49, %48 : vector<16x128xf32>
    %51 = math.sin %50 : vector<16x128xf32>
    %c0_28 = arith.constant 0 : index
    %c0_29 = arith.constant 0 : index
    %52 = vector.load %arg7[%c0_28, %c0_29] : memref<128x2xf32, #tpu.memory_space<vmem>>, vector<128x2xf32>
    %cst_30 = arith.constant dense<0.000000e+00> : vector<16x2xf32>
    %53 = tpu.matmul %51, %52, %cst_30 {dimension_numbers = #tpu.dot_dimension_numbers<[1], [0], [0], [1], [0, 0, 1, 1], [], []>} : vector<16x128xf32>, vector<128x2xf32>, vector<16x2xf32> -> vector<16x2xf32>
    %c0_31 = arith.constant 0 : index
    %c0_32 = arith.constant 0 : index
    %54 = vector.load %arg8[%c0_31, %c0_32] : memref<1x2xf32, #tpu.memory_space<vmem>>, vector<1x2xf32>
    %55 = vector.broadcast %54 : vector<1x2xf32> to vector<16x2xf32>
    %56 = arith.addf %53, %55 : vector<16x2xf32>
    %57 = tpu.iota {dimensions = array<i32: 1>} : vector<16x2xi32>
    %c1_i32 = arith.constant 1 : i32
    %58 = vector.broadcast %c1_i32 : i32 to vector<16x2xi32>
    %59 = arith.cmpi sge, %57, %58 : vector<16x2xi32>
    %cst_33 = arith.constant 0.000000e+00 : f32
    %60 = vector.shape_cast %4 : vector<16x1xf32> to vector<16x1xf32>
    %61 = vector.broadcast %60 : vector<16x1xf32> to vector<16x2xf32>
    %62 = vector.broadcast %cst_33 : f32 to vector<16x2xf32>
    %63 = arith.select %59, %61, %62 : vector<16x2xi1>, vector<16x2xf32>
    %64 = arith.subf %56, %63 : vector<16x2xf32>
    %c0_34 = arith.constant 0 : index
    %c0_35 = arith.constant 0 : index
    %65 = vector.load %arg9[%c0_34, %c0_35] : memref<16x2xf32, #tpu.memory_space<vmem>>, vector<16x2xf32>
    tpu.vector_store %arg9[%c0_34, %c0_35], %64 {strides = array<i32>} : memref<16x2xf32, #tpu.memory_space<vmem>>, vector<16x2xf32>,
    return
  }
  func.func @transform_0(%arg0: i32) -> i32 {
    %c0_i32 = arith.constant 0 : i32
    %c0_i32_0 = arith.constant 0 : i32
    return %c0_i32 : i32
  }
  func.func @transform_1(%arg0: i32) -> (i32, i32) {
    %c0_i32 = arith.constant 0 : i32
    %c0_i32_0 = arith.constant 0 : i32
    return %arg0, %c0_i32 : i32, i32
  }
  func.func @transform_2(%arg0: i32) -> (i32, i32) {
    %c0_i32 = arith.constant 0 : i32
    %c0_i32_0 = arith.constant 0 : i32
    %c0_i32_1 = arith.constant 0 : i32
    return %c0_i32, %c0_i32_0 : i32, i32
  }
  func.func @transform_3(%arg0: i32) -> (i32, i32) {
    %c0_i32 = arith.constant 0 : i32
    %c0_i32_0 = arith.constant 0 : i32
    %c0_i32_1 = arith.constant 0 : i32
    return %c0_i32, %c0_i32_0 : i32, i32
  }
  func.func @transform_4(%arg0: i32) -> (i32, i32, i32) {
    %c0_i32 = arith.constant 0 : i32
    %c0_i32_0 = arith.constant 0 : i32
    %c0_i32_1 = arith.constant 0 : i32
    %c0_i32_2 = arith.constant 0 : i32
    return %c0_i32, %c0_i32_0, %c0_i32_1 : i32, i32, i32
  }
  func.func @transform_5(%arg0: i32) -> (i32, i32, i32) {
    %c0_i32 = arith.constant 0 : i32
    %c0_i32_0 = arith.constant 0 : i32
    %c0_i32_1 = arith.constant 0 : i32
    %c0_i32_2 = arith.constant 0 : i32
    return %c0_i32, %c0_i32_0, %c0_i32_1 : i32, i32, i32
  }
  func.func @transform_6(%arg0: i32) -> (i32, i32) {
    %c0_i32 = arith.constant 0 : i32
    %c0_i32_0 = arith.constant 0 : i32
    %c0_i32_1 = arith.constant 0 : i32
    return %c0_i32, %c0_i32_0 : i32, i32
  }
  func.func @transform_7(%arg0: i32) -> (i32, i32) {
    %c0_i32 = arith.constant 0 : i32
    %c0_i32_0 = arith.constant 0 : i32
    %c0_i32_1 = arith.constant 0 : i32
    return %c0_i32, %c0_i32_0 : i32, i32
  }
  func.func @transform_8(%arg0: i32) -> (i32, i32) {
    %c0_i32 = arith.constant 0 : i32
    %c0_i32_0 = arith.constant 0 : i32
    return %arg0, %c0_i32 : i32, i32
  }
}

</mosaic_0001>

<llo_original>
// kernel: tpu_custom_call.1
$region0: #{tpu_custom_call.1}
  #allocation0 [shape = 'u32[]', space=smem, size = 0x4, offset = 0x4, fixed_abs, tag = 'smem constant byte address 0x4 - core index']
  #allocation1 [shape = 'u32[72,128]{1,0:T(1,128)}', space=vmem, size = 0x9000, scoped, tag = 'internal scratch']
  #allocation2 [shape = 'f32[1]{0:T(128)S(6)}', space=smem, size = 0x200, scoped, tag = 'scoped memory for tpu_custom_call.1']
  %s0 = inlined_call_operand.<no memory space> [shape: f32[1], index: 0, kind: input, shape index: {}]
  %s1 = inlined_call_operand.vmem [shape: f32[16,3], index: 1, kind: input, shape index: {}]
  %s2 = inlined_call_operand.vmem [shape: f32[2,128], index: 2, kind: input, shape index: {}]
  %s3 = inlined_call_operand.vmem [shape: f32[1,128], index: 3, kind: input, shape index: {}]
  %s4 = inlined_call_operand.hbm [shape: f32[3,128,128], index: 4, kind: input, shape index: {}]
  %s5 = inlined_call_operand.vmem [shape: f32[3,1,128], index: 5, kind: input, shape index: {}]
  %s6 = inlined_call_operand.vmem [shape: f32[128,2], index: 6, kind: input, shape index: {}]
  %s7 = inlined_call_operand.vmem [shape: f32[1,2], index: 7, kind: input, shape index: {}]
  %s8 = inlined_call_operand.vmem [shape: f32[16,2], index: 8, kind: output, shape index: {}]
  %s9 = sld [smem:[#allocation0]]
  $region46: #{tpu_custom_call.1} parent=0
    _
  %s11 = ssub.s32 1, %s9
  %s12 = scalar_select 0, %s11, %s9
  %13 = sst [smem:[#allocation2]] %s0
  $region1: #{tpu_custom_call.1} parent=0
    #allocation3 [shape = 'u8[196608]{0}', space=vmem, size = 0x30000, scoped, tag = 'input window, operand 4, single buffered']
    #allocation4 [shape = 's32[1]{0}', space=sflag, size = 0x4, scoped, tag = 'scoped memory for tpu_custom_call.1']
    %14 = vsyncpa [#allocation4], 0
    // Predicated region
    $region2: #{tpu_custom_call.1} parent=1 // pred_check
      _
    $region3: #{tpu_custom_call.1} parent=1 // pred_check_branch
      %16 = sbr.rel (0) target = $region5
    $region4: #{tpu_custom_call.1} parent=1 // pred_region
      _
    $region5: #{tpu_custom_call.1} parent=1 // pred_fallthru
      _
    // Predicated region
    $region6: #{tpu_custom_call.1} parent=1 // pred_check
      _
    $region7: #{tpu_custom_call.1} parent=1 // pred_check_branch
      %18 = sbr.rel (0) target = $region9
    $region8: #{tpu_custom_call.1} parent=1 // pred_region
      _
    $region9: #{tpu_custom_call.1} parent=1 // pred_fallthru
      _
    // Predicated region
    $region10: #{tpu_custom_call.1} parent=1 // pred_check
      _
    $region11: #{tpu_custom_call.1} parent=1 // pred_check_branch
      %20 = sbr.rel (0) target = $region13
    $region12: #{tpu_custom_call.1} parent=1 // pred_region
      _
    $region13: #{tpu_custom_call.1} parent=1 // pred_fallthru
      _
    // Predicated region
    $region14: #{tpu_custom_call.1} parent=1 // pred_check
      _
    $region15: #{tpu_custom_call.1} parent=1 // pred_check_branch
      %22 = sbr.rel (0) target = $region17
    $region16: #{tpu_custom_call.1} parent=1 // pred_region
      _
    $region17: #{tpu_custom_call.1} parent=1 // pred_fallthru
      _
    // Predicated region
    $region18: #{tpu_custom_call.1} parent=1 // pred_check
      _
    $region19: #{tpu_custom_call.1} parent=1 // pred_check_branch
      %24 = sbr.rel (0) target = $region21
    $region20: #{tpu_custom_call.1} parent=1 // pred_region
      %26 = vsyncadd [#allocation4], 0
      %s27 = sshll.u32 %s4, 4
      %s28 = int_to_ptr.hbm [resolvable:$true] %s27
      %s29 = sshll.u32 [#allocation3], 4
      %s30 = int_to_ptr.vmem [resolvable:$true] %s29
      %35 = dma.hbm_to_vmem [thread:$0]  %s28, 6144, %s30, [#allocation4], 128, 128, 8
    $region21: #{tpu_custom_call.1} parent=1 // pred_fallthru
      _
    // Predicated region
    $region22: #{tpu_custom_call.1} parent=1 // pred_check
      _
    $region23: #{tpu_custom_call.1} parent=1 // pred_check_branch
      %37 = sbr.rel (0) target = $region25
    $region24: #{tpu_custom_call.1} parent=1 // pred_region
      _
    $region25: #{tpu_custom_call.1} parent=1 // pred_fallthru
      _
    // Predicated region
    $region26: #{tpu_custom_call.1} parent=1 // pred_check
      _
    $region27: #{tpu_custom_call.1} parent=1 // pred_check_branch
      %39 = sbr.rel (0) target = $region29
    $region28: #{tpu_custom_call.1} parent=1 // pred_region
      _
    $region29: #{tpu_custom_call.1} parent=1 // pred_fallthru
      _
    // Predicated region
    $region30: #{tpu_custom_call.1} parent=1 // pred_check
      _
    $region31: #{tpu_custom_call.1} parent=1 // pred_check_branch
      %41 = sbr.rel (0) target = $region33
    $region32: #{tpu_custom_call.1} parent=1 // pred_region
      _
    $region33: #{tpu_custom_call.1} parent=1 // pred_fallthru
      _
    // Predicated region
    $region34: #{tpu_custom_call.1} parent=1 // pred_check
      _
    $region35: #{tpu_custom_call.1} parent=1 // pred_check_branch
      %43 = sbr.rel (0) target = $region37
    $region36: #{tpu_custom_call.1} parent=1 // pred_region
      %45 = dma.done [#allocation4], 6144
    $region37: #{tpu_custom_call.1} parent=1 // pred_fallthru
      _
    %s46 = sld [smem:[#allocation2]]
    %s47 = smul.f32 %s46, 10.0
    %s48 = smul.f32 %s47, 30.0
    %v49 = vld [vmem:[%s1] sm:$0xff]
    %v50 = vld [vmem:[%s1 + $0x8] sm:$0xff]
    %v51 = vld [vmem:[%s3] sm:$0x1]
    %v52 = vld [vmem:[%s2] sm:$0x1]
    %54 = vset.pattern.permute.xlu0 0
    %55 = vperm.xlu0 %54, %v49
    %v56 = vpop.permute.xlu0 %55
    %59 = vset.pattern.permute.xlu0 0
    %60 = vperm.xlu0 %59, %v50
    %v61 = vpop.permute.xlu0 %60
    %v63 = vperm.slane %v52, 0
    %v64 = vmul.f32 %v56, %v63
    %v65 = vmul.f32 %v61, %v63
    %v67 = vperm.slane %v51, 0
    %v69 = vadd.f32 %v67, %v64
    %v70 = vadd.f32 %v67, %v65
    %v71 = vld [vmem:[%s2 + $0x1] sm:$0x1]
    %72 = vset.pattern.permute.xlu0 1
    %73 = vperm.xlu0 %72, %v49
    %v74 = vpop.permute.xlu0 %73
    %76 = vset.pattern.permute.xlu0 1
    %77 = vperm.xlu0 %76, %v50
    %v78 = vpop.permute.xlu0 %77
    %v80 = vperm.slane %v71, 0
    %v81 = vmul.f32 %v74, %v80
    %v82 = vmul.f32 %v78, %v80
    %v83 = vadd.f32 %v69, %v81
    %v84 = vadd.f32 %v70, %v82
    %v85 = vstv %s48
    %v86 = vmul.f32 %v85, %v83
    %v87 = vmul.f32 %v85, %v84
    %v88 = vand.u32 2147483647, %v86
    %vm89 = vcmp.le.f32.partialorder %v88, 0.7853982
    %vm90 = vcmp.lt.s32.totalorder %v86, 0
    %v91 = vand.u32 %v86, 2139095040
    %v92 = vshrl.u32 %v91, 23
    %v93 = vsub.s32 %v92, 127
    %v94 = vand.u32 2147483647, %v86
    %v95 = vand.u32 %v94, 8388607
    %v96 = vor.u32 %v95, 8388608
    %v97 = vsub.s32 0, %v96
    %v98 = vadd.s32 %v93, 1
    %vm99 = vcmp.gt.s32.totalorder %v98, 0
    %v100 = vsel %vm99, %v98, 0
    %v101 = vshrl.u32 %v100, 5
    %v102 = vand.u32 %v100, 31
    %v103 = vsub.s32 32, %v102
    %v104 = vshrl.u32 683565275, %v103
    %v105 = vshll.u32 683565275, %v102
    %v106 = vshrl.u32 2475754826, %v103
    %v107 = vor.u32 %v105, %v106
    %v108 = vshll.u32 2475754826, %v102
    %v109 = vshrl.u32 2131351028, %v103
    %v110 = vor.u32 %v108, %v109
    %v111 = vshll.u32 2131351028, %v102
    %v112 = vshrl.u32 2102212464, %v103
    %v113 = vor.u32 %v111, %v112
    %v114 = vshll.u32 2102212464, %v102
    %v115 = vshrl.u32 920167782, %v103
    %v116 = vor.u32 %v114, %v115
    %v117 = vshll.u32 920167782, %v102
    %v118 = vshrl.u32 1326507024, %v103
    %v119 = vor.u32 %v117, %v118
    %vm120 = vcmp.lt.s32.totalorder %v101, 1
    %vm121 = vcmp.lt.s32.totalorder %v101, 2
    %vm122 = vcmp.lt.s32.totalorder %v101, 3
    %vm123 = vcmp.lt.s32.totalorder %v101, 4
    %v124 = vsel %vm120, %v104, %v107
    %v125 = vsel %vm123, %v113, 2102212464
    %v126 = vsel %vm122, %v110, %v125
    %v127 = vsel %vm121, %v124, %v126
    %v128 = vsel %vm120, %v107, %v110
    %v129 = vsel %vm123, %v116, 920167782
    %v130 = vsel %vm122, %v113, %v129
    %v131 = vsel %vm121, %v128, %v130
    %v132 = vsel %vm120, %v110, %v113
    %v133 = vsel %vm123, %v119, 1326507024
    %v134 = vsel %vm122, %v116, %v133
    %v135 = vsel %vm121, %v132, %v134
    %v136 = vshll.u32 %v96, 8
    %v137 = vand.u32 %v136, 65535
    %v138 = vshrl.u32 %v136, 16
    %v139 = vand.u32 %v135, 65535
    %v140 = vshrl.u32 %v135, 16
    %v141 = vmul.u32 %v137, %v139
    %v142 = vmul.u32 %v137, %v140
    %v143 = vmul.u32 %v138, %v139
    %v144 = vmul.u32 %v138, %v140
    %v145 = vshll.u32 %v142, 16
    %v146 = vshrl.u32 %v142, 16
    %v147 = vshll.u32 %v143, 16
    %v148 = vshrl.u32 %v143, 16
    %vm149 = vc.u32 %v141, %v145
    %v150 = vsel %vm149, 1, 0
    %v151 = vadd.s32 %v141, %v145
    %v152 = vadd.s32 %v144, %v150
    %vm153 = vc.u32 %v151, %v147
    %v154 = vsel %vm153, 1, 0
    %v155 = vadd.s32 %v151, %v147
    %v156 = vadd.s32 %v152, %v154
    %v157 = vadd.s32 %v156, %v146
    %v158 = vadd.s32 %v157, %v148
    %v159 = vand.u32 %v136, 65535
    %v160 = vshrl.u32 %v136, 16
    %v161 = vand.u32 %v131, 65535
    %v162 = vshrl.u32 %v131, 16
    %v163 = vmul.u32 %v159, %v161
    %v164 = vmul.u32 %v159, %v162
    %v165 = vmul.u32 %v160, %v161
    %v166 = vmul.u32 %v160, %v162
    %v167 = vshll.u32 %v164, 16
    %v168 = vshrl.u32 %v164, 16
    %v169 = vshll.u32 %v165, 16
    %v170 = vshrl.u32 %v165, 16
    %vm171 = vc.u32 %v163, %v167
    %v172 = vsel %vm171, 1, 0
    %v173 = vadd.s32 %v163, %v167
    %v174 = vadd.s32 %v166, %v172
    %vm175 = vc.u32 %v173, %v169
    %v176 = vsel %vm175, 1, 0
    %v177 = vadd.s32 %v173, %v169
    %v178 = vadd.s32 %v174, %v176
    %v179 = vadd.s32 %v178, %v168
    %v180 = vadd.s32 %v179, %v170
    %v181 = vmul.u32 %v136, %v127
    %v182 = vadd.s32 %v158, %v177
    %vm183 = vc.u32 %v158, %v177
    %v184 = vadd.s32 %v180, 1
    %v185 = vsel %vm183, %v184, %v180
    %v186 = vadd.s32 %v181, %v185
    %v187 = vadd.s32 %v186, 536870912
    %v188 = vshrl.u32 %v187, 30
    %v189 = vshll.u32 %v188, 30
    %v190 = vsub.s32 %v186, %v189
    %vm191 = vcmp.lt.s32.totalorder %v190, 0
    %v192 = vsub.s32 0, %v190
    %v193 = vsel %vm191, %v192, %v190
    %v194 = vclz %v193
    %v195 = vsub.s32 %v194, 2
    %vm196 = vcmp.gt.s32.totalorder 0, %v195
    %v197 = vsel %vm196, 0, %v195
    %v198 = vsub.s32 32, %v197
    %v199 = vshll.u32 %v190, %v197
    %v200 = vshrl.u32 %v182, %v198
    %v201 = vor.u32 %v199, %v200
    %v202 = vsub.s32 4294967266, %v197
    %v203 = vadd.s32 %v202, 127
    %v204 = vshll.u32 %v203, 23
    %v205 = vor.u32 4788187, %v204
    %v206 = vand.u32 2147483647, %v205
    %v208 = vcvt.s32.f32 %v201
    %v209 = vmul.f32 %v208, %v206
    %v210 = vxor.u32 %v209, 2147483648
    %v211 = vsel %vm90, %v210, %v209
    %v212 = vsub.s32 4, %v188
    %v213 = vsel %vm90, %v212, %v188
    %v214 = vsel %vm89, %v86, %v211
    %v215 = vsel %vm89, 0, %v213
    %v216 = vmul.f32 %v214, %v214
    %v217 = vmul.f32 %v216, -0.001358992
    %v218 = vadd.f32 %v217, 0.041655596
    %v219 = vmul.f32 %v216, %v218
    %v220 = vadd.f32 %v219, -0.4999988
    %v221 = vmul.f32 %v216, %v220
    %v222 = vadd.f32 1.0, %v221
    %v223 = vmul.f32 %v214, %v214
    %v224 = vmul.f32 %v223, -0.00019511016
    %v225 = vadd.f32 %v224, 0.008332121
    %v226 = vmul.f32 %v223, %v225
    %v227 = vadd.f32 %v226, -0.16666654
    %v228 = vmul.f32 %v223, %v227
    %v229 = vadd.f32 %v228, 1.0
    %v230 = vmul.f32 %v229, %v214
    %vm231 = vweird.f32 %v86
    %v232 = vadd.s32 %v215, 3
    %v233 = vand.u32 %v232, 3
    %vm234 = vcmp.lt.s32.totalorder %v233, 2
    %vm235 = vcmp.eq.s32.totalorder %v233, 0
    %v236 = vxor.u32 %v230, 2147483648
    %v237 = vsel %vm235, %v222, %v236
    %vm238 = vcmp.eq.s32.totalorder %v233, 2
    %v239 = vxor.u32 %v222, 2147483648
    %v240 = vsel %vm238, %v239, %v230
    %v241 = vsel %vm234, %v237, %v240
    %v242 = vsel %vm231, nan, %v241
    %v243 = vand.u32 2147483647, %v87
    %vm244 = vcmp.le.f32.partialorder %v243, 0.7853982
    %vm245 = vcmp.lt.s32.totalorder %v87, 0
    %v246 = vand.u32 %v87, 2139095040
    %v247 = vshrl.u32 %v246, 23
    %v248 = vsub.s32 %v247, 127
    %v249 = vand.u32 2147483647, %v87
    %v250 = vand.u32 %v249, 8388607
    %v251 = vor.u32 %v250, 8388608
    %v252 = vsub.s32 0, %v251
    %v253 = vadd.s32 %v248, 1
    %vm254 = vcmp.gt.s32.totalorder %v253, 0
    %v255 = vsel %vm254, %v253, 0
    %v256 = vshrl.u32 %v255, 5
    %v257 = vand.u32 %v255, 31
    %v258 = vsub.s32 32, %v257
    %v259 = vshrl.u32 683565275, %v258
    %v260 = vshll.u32 683565275, %v257
    %v261 = vshrl.u32 2475754826, %v258
    %v262 = vor.u32 %v260, %v261
    %v263 = vshll.u32 2475754826, %v257
    %v264 = vshrl.u32 2131351028, %v258
    %v265 = vor.u32 %v263, %v264
    %v266 = vshll.u32 2131351028, %v257
    %v267 = vshrl.u32 2102212464, %v258
    %v268 = vor.u32 %v266, %v267
    %v269 = vshll.u32 2102212464, %v257
    %v270 = vshrl.u32 920167782, %v258
    %v271 = vor.u32 %v269, %v270
    %v272 = vshll.u32 920167782, %v257
    %v273 = vshrl.u32 1326507024, %v258
    %v274 = vor.u32 %v272, %v273
    %vm275 = vcmp.lt.s32.totalorder %v256, 1
    %vm276 = vcmp.lt.s32.totalorder %v256, 2
    %vm277 = vcmp.lt.s32.totalorder %v256, 3
    %vm278 = vcmp.lt.s32.totalorder %v256, 4
    %v279 = vsel %vm275, %v259, %v262
    %v280 = vsel %vm278, %v268, 2102212464
    %v281 = vsel %vm277, %v265, %v280
    %v282 = vsel %vm276, %v279, %v281
    %v283 = vsel %vm275, %v262, %v265
    %v284 = vsel %vm278, %v271, 920167782
    %v285 = vsel %vm277, %v268, %v284
    %v286 = vsel %vm276, %v283, %v285
    %v287 = vsel %vm275, %v265, %v268
    %v288 = vsel %vm278, %v274, 1326507024
    %v289 = vsel %vm277, %v271, %v288
    %v290 = vsel %vm276, %v287, %v289
    %v291 = vshll.u32 %v251, 8
    %v292 = vand.u32 %v291, 65535
    %v293 = vshrl.u32 %v291, 16
    %v294 = vand.u32 %v290, 65535
    %v295 = vshrl.u32 %v290, 16
    %v296 = vmul.u32 %v292, %v294
    %v297 = vmul.u32 %v292, %v295
    %v298 = vmul.u32 %v293, %v294
    %v299 = vmul.u32 %v293, %v295
    %v300 = vshll.u32 %v297, 16
    %v301 = vshrl.u32 %v297, 16
    %v302 = vshll.u32 %v298, 16
    %v303 = vshrl.u32 %v298, 16
    %vm304 = vc.u32 %v296, %v300
    %v305 = vsel %vm304, 1, 0
    %v306 = vadd.s32 %v296, %v300
    %v307 = vadd.s32 %v299, %v305
    %vm308 = vc.u32 %v306, %v302
    %v309 = vsel %vm308, 1, 0
    %v310 = vadd.s32 %v306, %v302
    %v311 = vadd.s32 %v307, %v309
    %v312 = vadd.s32 %v311, %v301
    %v313 = vadd.s32 %v312, %v303
    %v314 = vand.u32 %v291, 65535
    %v315 = vshrl.u32 %v291, 16
    %v316 = vand.u32 %v286, 65535
    %v317 = vshrl.u32 %v286, 16
    %v318 = vmul.u32 %v314, %v316
    %v319 = vmul.u32 %v314, %v317
    %v320 = vmul.u32 %v315, %v316
    %v321 = vmul.u32 %v315, %v317
    %v322 = vshll.u32 %v319, 16
    %v323 = vshrl.u32 %v319, 16
    %v324 = vshll.u32 %v320, 16
    %v325 = vshrl.u32 %v320, 16
    %vm326 = vc.u32 %v318, %v322
    %v327 = vsel %vm326, 1, 0
    %v328 = vadd.s32 %v318, %v322
    %v329 = vadd.s32 %v321, %v327
    %vm330 = vc.u32 %v328, %v324
    %v331 = vsel %vm330, 1, 0
    %v332 = vadd.s32 %v328, %v324
    %v333 = vadd.s32 %v329, %v331
    %v334 = vadd.s32 %v333, %v323
    %v335 = vadd.s32 %v334, %v325
    %v336 = vmul.u32 %v291, %v282
    %v337 = vadd.s32 %v313, %v332
    %vm338 = vc.u32 %v313, %v332
    %v339 = vadd.s32 %v335, 1
    %v340 = vsel %vm338, %v339, %v335
    %v341 = vadd.s32 %v336, %v340
    %v342 = vadd.s32 %v341, 536870912
    %v343 = vshrl.u32 %v342, 30
    %v344 = vshll.u32 %v343, 30
    %v345 = vsub.s32 %v341, %v344
    %vm346 = vcmp.lt.s32.totalorder %v345, 0
    %v347 = vsub.s32 0, %v345
    %v348 = vsel %vm346, %v347, %v345
    %v349 = vclz %v348
    %v350 = vsub.s32 %v349, 2
    %vm351 = vcmp.gt.s32.totalorder 0, %v350
    %v352 = vsel %vm351, 0, %v350
    %v353 = vsub.s32 32, %v352
    %v354 = vshll.u32 %v345, %v352
    %v355 = vshrl.u32 %v337, %v353
    %v356 = vor.u32 %v354, %v355
    %v357 = vsub.s32 4294967266, %v352
    %v358 = vadd.s32 %v357, 127
    %v359 = vshll.u32 %v358, 23
    %v360 = vor.u32 4788187, %v359
    %v361 = vand.u32 2147483647, %v360
    %v363 = vcvt.s32.f32 %v356
    %v364 = vmul.f32 %v363, %v361
    %v365 = vxor.u32 %v364, 2147483648
    %v366 = vsel %vm245, %v365, %v364
    %v367 = vsub.s32 4, %v343
    %v368 = vsel %vm245, %v367, %v343
    %v369 = vsel %vm244, %v87, %v366
    %v370 = vsel %vm244, 0, %v368
    %v371 = vmul.f32 %v369, %v369
    %v372 = vmul.f32 %v371, -0.001358992
    %v373 = vadd.f32 %v372, 0.041655596
    %v374 = vmul.f32 %v371, %v373
    %v375 = vadd.f32 %v374, -0.4999988
    %v376 = vmul.f32 %v371, %v375
    %v377 = vadd.f32 1.0, %v376
    %v378 = vmul.f32 %v369, %v369
    %v379 = vmul.f32 %v378, -0.00019511016
    %v380 = vadd.f32 %v379, 0.008332121
    %v381 = vmul.f32 %v378, %v380
    %v382 = vadd.f32 %v381, -0.16666654
    %v383 = vmul.f32 %v378, %v382
    %v384 = vadd.f32 %v383, 1.0
    %v385 = vmul.f32 %v384, %v369
    %vm386 = vweird.f32 %v87
    %v387 = vadd.s32 %v370, 3
    %v388 = vand.u32 %v387, 3
    %vm389 = vcmp.lt.s32.totalorder %v388, 2
    %vm390 = vcmp.eq.s32.totalorder %v388, 0
    %v391 = vxor.u32 %v385, 2147483648
    %v392 = vsel %vm390, %v377, %v391
    %vm393 = vcmp.eq.s32.totalorder %v388, 2
    %v394 = vxor.u32 %v377, 2147483648
    %v395 = vsel %vm393, %v394, %v385
    %v396 = vsel %vm389, %v392, %v395
    %v397 = vsel %vm386, nan, %v396
    %v398 = vld [vmem:[#allocation3] sm:$0xff]
    %v399 = vld [vmem:[#allocation3 + $0x8] sm:$0xff]
    %v400 = vld [vmem:[#allocation3 + $0x10] sm:$0xff]
    %v401 = vld [vmem:[#allocation3 + $0x18] sm:$0xff]
    %v402 = vld [vmem:[#allocation3 + $0x20] sm:$0xff]
    %v403 = vld [vmem:[#allocation3 + $0x28] sm:$0xff]
    %v404 = vld [vmem:[#allocation3 + $0x30] sm:$0xff]
    %v405 = vld [vmem:[#allocation3 + $0x38] sm:$0xff]
    %v406 = vld [vmem:[#allocation3 + $0x40] sm:$0xff]
    %v407 = vld [vmem:[#allocation3 + $0x48] sm:$0xff]
    %v408 = vld [vmem:[#allocation3 + $0x50] sm:$0xff]
    %v409 = vld [vmem:[#allocation3 + $0x58] sm:$0xff]
    %v410 = vld [vmem:[#allocation3 + $0x60] sm:$0xff]
    %v411 = vld [vmem:[#allocation3 + $0x68] sm:$0xff]
    %v412 = vld [vmem:[#allocation3 + $0x70] sm:$0xff]
    %v413 = vld [vmem:[#allocation3 + $0x78] sm:$0xff]
    %v414 = vld [vmem:[%s5] sm:$0x1]
    %v416 = vperm.slane %v414, 0
    %418 = vmatpush.msra.mxu0 %v413
    %419 = vmatpush.msra.mxu0 %v412
    %420 = vmatpush.msra.mxu0 %v411
    %421 = vmatpush.msra.mxu0 %v410
    %422 = vmatpush.msra.mxu0 %v409
    %423 = vmatpush.msra.mxu0 %v408
    %424 = vmatpush.msra.mxu0 %v407
    %425 = vmatpush.msra.mxu0 %v406
    %426 = vmatpush.msra.mxu0 %v405
    %427 = vmatpush.msra.mxu0 %v404
    %428 = vmatpush.msra.mxu0 %v403
    %429 = vmatpush.msra.mxu0 %v402
    %430 = vmatpush.msra.mxu0 %v401
    %431 = vmatpush.msra.mxu0 %v400
    %432 = vmatpush.msra.mxu0 %v399
    %433 = vmatpush.msra.mxu0 %v398
    %434 = vmatmul.f32.gmra.mxu0 %v242
    %v435 = vpop.f32.mrf.mxu0
    %v436 = vadd.f32 %v416, %v435
    %437 = vmatmul.f32.gmra.mxu0 %v397
    %v438 = vpop.f32.mrf.mxu0
    %v439 = vadd.f32 %v416, %v438
    %440 = vdwg.mxu0
    %v441 = vmul.f32 %v85, %v436
    %v442 = vmul.f32 %v85, %v439
    %v443 = vand.u32 2147483647, %v441
    %vm444 = vcmp.le.f32.partialorder %v443, 0.7853982
    %vm445 = vcmp.lt.s32.totalorder %v441, 0
    %v446 = vand.u32 %v441, 2139095040
    %v447 = vshrl.u32 %v446, 23
    %v448 = vsub.s32 %v447, 127
    %v449 = vand.u32 2147483647, %v441
    %v450 = vand.u32 %v449, 8388607
    %v451 = vor.u32 %v450, 8388608
    %v452 = vsub.s32 0, %v451
    %v453 = vadd.s32 %v448, 1
    %vm454 = vcmp.gt.s32.totalorder %v453, 0
    %v455 = vsel %vm454, %v453, 0
    %v456 = vshrl.u32 %v455, 5
    %v457 = vand.u32 %v455, 31
    %v458 = vsub.s32 32, %v457
    %v459 = vshrl.u32 683565275, %v458
    %v460 = vshll.u32 683565275, %v457
    %v461 = vshrl.u32 2475754826, %v458
    %v462 = vor.u32 %v460, %v461
    %v463 = vshll.u32 2475754826, %v457
    %v464 = vshrl.u32 2131351028, %v458
    %v465 = vor.u32 %v463, %v464
    %v466 = vshll.u32 2131351028, %v457
    %v467 = vshrl.u32 2102212464, %v458
    %v468 = vor.u32 %v466, %v467
    %v469 = vshll.u32 2102212464, %v457
    %v470 = vshrl.u32 920167782, %v458
    %v471 = vor.u32 %v469, %v470
    %v472 = vshll.u32 920167782, %v457
    %v473 = vshrl.u32 1326507024, %v458
    %v474 = vor.u32 %v472, %v473
    %vm475 = vcmp.lt.s32.totalorder %v456, 1
    %vm476 = vcmp.lt.s32.totalorder %v456, 2
    %vm477 = vcmp.lt.s32.totalorder %v456, 3
    %vm478 = vcmp.lt.s32.totalorder %v456, 4
    %v479 = vsel %vm475, %v459, %v462
    %v480 = vsel %vm478, %v468, 2102212464
    %v481 = vsel %vm477, %v465, %v480
    %v482 = vsel %vm476, %v479, %v481
    %v483 = vsel %vm475, %v462, %v465
    %v484 = vsel %vm478, %v471, 920167782
    %v485 = vsel %vm477, %v468, %v484
    %v486 = vsel %vm476, %v483, %v485
    %v487 = vsel %vm475, %v465, %v468
    %v488 = vsel %vm478, %v474, 1326507024
    %v489 = vsel %vm477, %v471, %v488
    %v490 = vsel %vm476, %v487, %v489
    %v491 = vshll.u32 %v451, 8
    %v492 = vand.u32 %v491, 65535
    %v493 = vshrl.u32 %v491, 16
    %v494 = vand.u32 %v490, 65535
    %v495 = vshrl.u32 %v490, 16
    %v496 = vmul.u32 %v492, %v494
    %v497 = vmul.u32 %v492, %v495
    %v498 = vmul.u32 %v493, %v494
    %v499 = vmul.u32 %v493, %v495
    %v500 = vshll.u32 %v497, 16
    %v501 = vshrl.u32 %v497, 16
    %v502 = vshll.u32 %v498, 16
    %v503 = vshrl.u32 %v498, 16
    %vm504 = vc.u32 %v496, %v500
    %v505 = vsel %vm504, 1, 0
    %v506 = vadd.s32 %v496, %v500
    %v507 = vadd.s32 %v499, %v505
    %vm508 = vc.u32 %v506, %v502
    %v509 = vsel %vm508, 1, 0
    %v510 = vadd.s32 %v506, %v502
    %v511 = vadd.s32 %v507, %v509
    %v512 = vadd.s32 %v511, %v501
    %v513 = vadd.s32 %v512, %v503
    %v514 = vand.u32 %v491, 65535
    %v515 = vshrl.u32 %v491, 16
    %v516 = vand.u32 %v486, 65535
    %v517 = vshrl.u32 %v486, 16
    %v518 = vmul.u32 %v514, %v516
    %v519 = vmul.u32 %v514, %v517
    %v520 = vmul.u32 %v515, %v516
    %v521 = vmul.u32 %v515, %v517
    %v522 = vshll.u32 %v519, 16
    %v523 = vshrl.u32 %v519, 16
    %v524 = vshll.u32 %v520, 16
    %v525 = vshrl.u32 %v520, 16
    %vm526 = vc.u32 %v518, %v522
    %v527 = vsel %vm526, 1, 0
    %v528 = vadd.s32 %v518, %v522
    %v529 = vadd.s32 %v521, %v527
    %vm530 = vc.u32 %v528, %v524
    %v531 = vsel %vm530, 1, 0
    %v532 = vadd.s32 %v528, %v524
    %v533 = vadd.s32 %v529, %v531
    %v534 = vadd.s32 %v533, %v523
    %v535 = vadd.s32 %v534, %v525
    %v536 = vmul.u32 %v491, %v482
    %v537 = vadd.s32 %v513, %v532
    %vm538 = vc.u32 %v513, %v532
    %v539 = vadd.s32 %v535, 1
    %v540 = vsel %vm538, %v539, %v535
    %v541 = vadd.s32 %v536, %v540
    %v542 = vadd.s32 %v541, 536870912
    %v543 = vshrl.u32 %v542, 30
    %v544 = vshll.u32 %v543, 30
    %v545 = vsub.s32 %v541, %v544
    %vm546 = vcmp.lt.s32.totalorder %v545, 0
    %v547 = vsub.s32 0, %v545
    %v548 = vsel %vm546, %v547, %v545
    %v549 = vclz %v548
    %v550 = vsub.s32 %v549, 2
    %vm551 = vcmp.gt.s32.totalorder 0, %v550
    %v552 = vsel %vm551, 0, %v550
    %v553 = vsub.s32 32, %v552
    %v554 = vshll.u32 %v545, %v552
    %v555 = vshrl.u32 %v537, %v553
    %v556 = vor.u32 %v554, %v555
    %v557 = vsub.s32 4294967266, %v552
    %v558 = vadd.s32 %v557, 127
    %v559 = vshll.u32 %v558, 23
    %v560 = vor.u32 4788187, %v559
    %v561 = vand.u32 2147483647, %v560
    %v563 = vcvt.s32.f32 %v556
    %v564 = vmul.f32 %v563, %v561
    %v565 = vxor.u32 %v564, 2147483648
    %v566 = vsel %vm445, %v565, %v564
    %v567 = vsub.s32 4, %v543
    %v568 = vsel %vm445, %v567, %v543
    %v569 = vsel %vm444, %v441, %v566
    %v570 = vsel %vm444, 0, %v568
    %v571 = vmul.f32 %v569, %v569
    %v572 = vmul.f32 %v571, -0.001358992
    %v573 = vadd.f32 %v572, 0.041655596
    %v574 = vmul.f32 %v571, %v573
    %v575 = vadd.f32 %v574, -0.4999988
    %v576 = vmul.f32 %v571, %v575
    %v577 = vadd.f32 1.0, %v576
    %v578 = vmul.f32 %v569, %v569
    %v579 = vmul.f32 %v578, -0.00019511016
    %v580 = vadd.f32 %v579, 0.008332121
    %v581 = vmul.f32 %v578, %v580
    %v582 = vadd.f32 %v581, -0.16666654
    %v583 = vmul.f32 %v578, %v582
    %v584 = vadd.f32 %v583, 1.0
    %v585 = vmul.f32 %v584, %v569
    %vm586 = vweird.f32 %v441
    %v587 = vadd.s32 %v570, 3
    %v588 = vand.u32 %v587, 3
    %vm589 = vcmp.lt.s32.totalorder %v588, 2
    %vm590 = vcmp.eq.s32.totalorder %v588, 0
    %v591 = vxor.u32 %v585, 2147483648
    %v592 = vsel %vm590, %v577, %v591
    %vm593 = vcmp.eq.s32.totalorder %v588, 2
    %v594 = vxor.u32 %v577, 2147483648
    %v595 = vsel %vm593, %v594, %v585
    %v596 = vsel %vm589, %v592, %v595
    %v597 = vsel %vm586, nan, %v596
    %v598 = vand.u32 2147483647, %v442
    %vm599 = vcmp.le.f32.partialorder %v598, 0.7853982
    %vm600 = vcmp.lt.s32.totalorder %v442, 0
    %v601 = vand.u32 %v442, 2139095040
    %v602 = vshrl.u32 %v601, 23
    %v603 = vsub.s32 %v602, 127
    %v604 = vand.u32 2147483647, %v442
    %v605 = vand.u32 %v604, 8388607
    %v606 = vor.u32 %v605, 8388608
    %v607 = vsub.s32 0, %v606
    %v608 = vadd.s32 %v603, 1
    %vm609 = vcmp.gt.s32.totalorder %v608, 0
    %v610 = vsel %vm609, %v608, 0
    %v611 = vshrl.u32 %v610, 5
    %v612 = vand.u32 %v610, 31
    %v613 = vsub.s32 32, %v612
    %v614 = vshrl.u32 683565275, %v613
    %v615 = vshll.u32 683565275, %v612
    %v616 = vshrl.u32 2475754826, %v613
    %v617 = vor.u32 %v615, %v616
    %v618 = vshll.u32 2475754826, %v612
    %v619 = vshrl.u32 2131351028, %v613
    %v620 = vor.u32 %v618, %v619
    %v621 = vshll.u32 2131351028, %v612
    %v622 = vshrl.u32 2102212464, %v613
    %v623 = vor.u32 %v621, %v622
    %v624 = vshll.u32 2102212464, %v612
    %v625 = vshrl.u32 920167782, %v613
    %v626 = vor.u32 %v624, %v625
    %v627 = vshll.u32 920167782, %v612
    %v628 = vshrl.u32 1326507024, %v613
    %v629 = vor.u32 %v627, %v628
    %vm630 = vcmp.lt.s32.totalorder %v611, 1
    %vm631 = vcmp.lt.s32.totalorder %v611, 2
    %vm632 = vcmp.lt.s32.totalorder %v611, 3
    %vm633 = vcmp.lt.s32.totalorder %v611, 4
    %v634 = vsel %vm630, %v614, %v617
    %v635 = vsel %vm633, %v623, 2102212464
    %v636 = vsel %vm632, %v620, %v635
    %v637 = vsel %vm631, %v634, %v636
    %v638 = vsel %vm630, %v617, %v620
    %v639 = vsel %vm633, %v626, 920167782
    %v640 = vsel %vm632, %v623, %v639
    %v641 = vsel %vm631, %v638, %v640
    %v642 = vsel %vm630, %v620, %v623
    %v643 = vsel %vm633, %v629, 1326507024
    %v644 = vsel %vm632, %v626, %v643
    %v645 = vsel %vm631, %v642, %v644
    %v646 = vshll.u32 %v606, 8
    %v647 = vand.u32 %v646, 65535
    %v648 = vshrl.u32 %v646, 16
    %v649 = vand.u32 %v645, 65535
    %v650 = vshrl.u32 %v645, 16
    %v651 = vmul.u32 %v647, %v649
    %v652 = vmul.u32 %v647, %v650
    %v653 = vmul.u32 %v648, %v649
    %v654 = vmul.u32 %v648, %v650
    %v655 = vshll.u32 %v652, 16
    %v656 = vshrl.u32 %v652, 16
    %v657 = vshll.u32 %v653, 16
    %v658 = vshrl.u32 %v653, 16
    %vm659 = vc.u32 %v651, %v655
    %v660 = vsel %vm659, 1, 0
    %v661 = vadd.s32 %v651, %v655
    %v662 = vadd.s32 %v654, %v660
    %vm663 = vc.u32 %v661, %v657
    %v664 = vsel %vm663, 1, 0
    %v665 = vadd.s32 %v661, %v657
    %v666 = vadd.s32 %v662, %v664
    %v667 = vadd.s32 %v666, %v656
    %v668 = vadd.s32 %v667, %v658
    %v669 = vand.u32 %v646, 65535
    %v670 = vshrl.u32 %v646, 16
    %v671 = vand.u32 %v641, 65535
    %v672 = vshrl.u32 %v641, 16
    %v673 = vmul.u32 %v669, %v671
    %v674 = vmul.u32 %v669, %v672
    %v675 = vmul.u32 %v670, %v671
    %v676 = vmul.u32 %v670, %v672
    %v677 = vshll.u32 %v674, 16
    %v678 = vshrl.u32 %v674, 16
    %v679 = vshll.u32 %v675, 16
    %v680 = vshrl.u32 %v675, 16
    %vm681 = vc.u32 %v673, %v677
    %v682 = vsel %vm681, 1, 0
    %v683 = vadd.s32 %v673, %v677
    %v684 = vadd.s32 %v676, %v682
    %vm685 = vc.u32 %v683, %v679
    %v686 = vsel %vm685, 1, 0
    %v687 = vadd.s32 %v683, %v679
    %v688 = vadd.s32 %v684, %v686
    %v689 = vadd.s32 %v688, %v678
    %v690 = vadd.s32 %v689, %v680
    %v691 = vmul.u32 %v646, %v637
    %v692 = vadd.s32 %v668, %v687
    %vm693 = vc.u32 %v668, %v687
    %v694 = vadd.s32 %v690, 1
    %v695 = vsel %vm693, %v694, %v690
    %v696 = vadd.s32 %v691, %v695
    %v697 = vadd.s32 %v696, 536870912
    %v698 = vshrl.u32 %v697, 30
    %v699 = vshll.u32 %v698, 30
    %v700 = vsub.s32 %v696, %v699
    %vm701 = vcmp.lt.s32.totalorder %v700, 0
    %v702 = vsub.s32 0, %v700
    %v703 = vsel %vm701, %v702, %v700
    %v704 = vclz %v703
    %v705 = vsub.s32 %v704, 2
    %vm706 = vcmp.gt.s32.totalorder 0, %v705
    %v707 = vsel %vm706, 0, %v705
    %v708 = vsub.s32 32, %v707
    %v709 = vshll.u32 %v700, %v707
    %v710 = vshrl.u32 %v692, %v708
    %v711 = vor.u32 %v709, %v710
    %v712 = vsub.s32 4294967266, %v707
    %v713 = vadd.s32 %v712, 127
    %v714 = vshll.u32 %v713, 23
    %v715 = vor.u32 4788187, %v714
    %v716 = vand.u32 2147483647, %v715
    %v718 = vcvt.s32.f32 %v711
    %v719 = vmul.f32 %v718, %v716
    %v720 = vxor.u32 %v719, 2147483648
    %v721 = vsel %vm600, %v720, %v719
    %v722 = vsub.s32 4, %v698
    %v723 = vsel %vm600, %v722, %v698
    %v724 = vsel %vm599, %v442, %v721
    %v725 = vsel %vm599, 0, %v723
    %v726 = vmul.f32 %v724, %v724
    %v727 = vmul.f32 %v726, -0.001358992
    %v728 = vadd.f32 %v727, 0.041655596
    %v729 = vmul.f32 %v726, %v728
    %v730 = vadd.f32 %v729, -0.4999988
    %v731 = vmul.f32 %v726, %v730
    %v732 = vadd.f32 1.0, %v731
    %v733 = vmul.f32 %v724, %v724
    %v734 = vmul.f32 %v733, -0.00019511016
    %v735 = vadd.f32 %v734, 0.008332121
    %v736 = vmul.f32 %v733, %v735
    %v737 = vadd.f32 %v736, -0.16666654
    %v738 = vmul.f32 %v733, %v737
    %v739 = vadd.f32 %v738, 1.0
    %v740 = vmul.f32 %v739, %v724
    %vm741 = vweird.f32 %v442
    %v742 = vadd.s32 %v725, 3
    %v743 = vand.u32 %v742, 3
    %vm744 = vcmp.lt.s32.totalorder %v743, 2
    %vm745 = vcmp.eq.s32.totalorder %v743, 0
    %v746 = vxor.u32 %v740, 2147483648
    %v747 = vsel %vm745, %v732, %v746
    %vm748 = vcmp.eq.s32.totalorder %v743, 2
    %v749 = vxor.u32 %v732, 2147483648
    %v750 = vsel %vm748, %v749, %v740
    %v751 = vsel %vm744, %v747, %v750
    %v752 = vsel %vm741, nan, %v751
    %s753 = scalar_lea.vmem [#allocation3], 128
    %v754 = vld [vmem:[%s753] sm:$0xff]
    %v755 = vld [vmem:[%s753 + $0x8] sm:$0xff]
    %v756 = vld [vmem:[%s753 + $0x10] sm:$0xff]
    %v757 = vld [vmem:[%s753 + $0x18] sm:$0xff]
    %v758 = vld [vmem:[%s753 + $0x20] sm:$0xff]
    %v759 = vld [vmem:[%s753 + $0x28] sm:$0xff]
    %v760 = vld [vmem:[%s753 + $0x30] sm:$0xff]
    %v761 = vld [vmem:[%s753 + $0x38] sm:$0xff]
    %v762 = vld [vmem:[%s753 + $0x40] sm:$0xff]
    %v763 = vld [vmem:[%s753 + $0x48] sm:$0xff]
    %v764 = vld [vmem:[%s753 + $0x50] sm:$0xff]
    %v765 = vld [vmem:[%s753 + $0x58] sm:$0xff]
    %v766 = vld [vmem:[%s753 + $0x60] sm:$0xff]
    %v767 = vld [vmem:[%s753 + $0x68] sm:$0xff]
    %v768 = vld [vmem:[%s753 + $0x70] sm:$0xff]
    %v769 = vld [vmem:[%s753 + $0x78] sm:$0xff]
    %s770 = scalar_lea.vmem %s5, 1
    %v771 = vld [vmem:[%s770] sm:$0x1]
    %v773 = vperm.slane %v771, 0
    %775 = vmatpush.msra.mxu0 %v769
    %776 = vmatpush.msra.mxu0 %v768
    %777 = vmatpush.msra.mxu0 %v767
    %778 = vmatpush.msra.mxu0 %v766
    %779 = vmatpush.msra.mxu0 %v765
    %780 = vmatpush.msra.mxu0 %v764
    %781 = vmatpush.msra.mxu0 %v763
    %782 = vmatpush.msra.mxu0 %v762
    %783 = vmatpush.msra.mxu0 %v761
    %784 = vmatpush.msra.mxu0 %v760
    %785 = vmatpush.msra.mxu0 %v759
    %786 = vmatpush.msra.mxu0 %v758
    %787 = vmatpush.msra.mxu0 %v757
    %788 = vmatpush.msra.mxu0 %v756
    %789 = vmatpush.msra.mxu0 %v755
    %790 = vmatpush.msra.mxu0 %v754
    %791 = vmatmul.f32.gmra.mxu0 %v597
    %v792 = vpop.f32.mrf.mxu0
    %v793 = vadd.f32 %v773, %v792
    %794 = vmatmul.f32.gmra.mxu0 %v752
    %v795 = vpop.f32.mrf.mxu0
    %v796 = vadd.f32 %v773, %v795
    %797 = vdwg.mxu0
    %v798 = vmul.f32 %v85, %v793
    %v799 = vmul.f32 %v85, %v796
    %v800 = vand.u32 2147483647, %v798
    %vm801 = vcmp.le.f32.partialorder %v800, 0.7853982
    %vm802 = vcmp.lt.s32.totalorder %v798, 0
    %v803 = vand.u32 %v798, 2139095040
    %v804 = vshrl.u32 %v803, 23
    %v805 = vsub.s32 %v804, 127
    %v806 = vand.u32 2147483647, %v798
    %v807 = vand.u32 %v806, 8388607
    %v808 = vor.u32 %v807, 8388608
    %v809 = vsub.s32 0, %v808
    %v810 = vadd.s32 %v805, 1
    %vm811 = vcmp.gt.s32.totalorder %v810, 0
    %v812 = vsel %vm811, %v810, 0
    %v813 = vshrl.u32 %v812, 5
    %v814 = vand.u32 %v812, 31
    %v815 = vsub.s32 32, %v814
    %v816 = vshrl.u32 683565275, %v815
    %v817 = vshll.u32 683565275, %v814
    %v818 = vshrl.u32 2475754826, %v815
    %v819 = vor.u32 %v817, %v818
    %v820 = vshll.u32 2475754826, %v814
    %v821 = vshrl.u32 2131351028, %v815
    %v822 = vor.u32 %v820, %v821
    %v823 = vshll.u32 2131351028, %v814
    %v824 = vshrl.u32 2102212464, %v815
    %v825 = vor.u32 %v823, %v824
    %v826 = vshll.u32 2102212464, %v814
    %v827 = vshrl.u32 920167782, %v815
    %v828 = vor.u32 %v826, %v827
    %v829 = vshll.u32 920167782, %v814
    %v830 = vshrl.u32 1326507024, %v815
    %v831 = vor.u32 %v829, %v830
    %vm832 = vcmp.lt.s32.totalorder %v813, 1
    %vm833 = vcmp.lt.s32.totalorder %v813, 2
    %vm834 = vcmp.lt.s32.totalorder %v813, 3
    %vm835 = vcmp.lt.s32.totalorder %v813, 4
    %v836 = vsel %vm832, %v816, %v819
    %v837 = vsel %vm835, %v825, 2102212464
    %v838 = vsel %vm834, %v822, %v837
    %v839 = vsel %vm833, %v836, %v838
    %v840 = vsel %vm832, %v819, %v822
    %v841 = vsel %vm835, %v828, 920167782
    %v842 = vsel %vm834, %v825, %v841
    %v843 = vsel %vm833, %v840, %v842
    %v844 = vsel %vm832, %v822, %v825
    %v845 = vsel %vm835, %v831, 1326507024
    %v846 = vsel %vm834, %v828, %v845
    %v847 = vsel %vm833, %v844, %v846
    %v848 = vshll.u32 %v808, 8
    %v849 = vand.u32 %v848, 65535
    %v850 = vshrl.u32 %v848, 16
    %v851 = vand.u32 %v847, 65535
    %v852 = vshrl.u32 %v847, 16
    %v853 = vmul.u32 %v849, %v851
    %v854 = vmul.u32 %v849, %v852
    %v855 = vmul.u32 %v850, %v851
    %v856 = vmul.u32 %v850, %v852
    %v857 = vshll.u32 %v854, 16
    %v858 = vshrl.u32 %v854, 16
    %v859 = vshll.u32 %v855, 16
    %v860 = vshrl.u32 %v855, 16
    %vm861 = vc.u32 %v853, %v857
    %v862 = vsel %vm861, 1, 0
    %v863 = vadd.s32 %v853, %v857
    %v864 = vadd.s32 %v856, %v862
    %vm865 = vc.u32 %v863, %v859
    %v866 = vsel %vm865, 1, 0
    %v867 = vadd.s32 %v863, %v859
    %v868 = vadd.s32 %v864, %v866
    %v869 = vadd.s32 %v868, %v858
    %v870 = vadd.s32 %v869, %v860
    %v871 = vand.u32 %v848, 65535
    %v872 = vshrl.u32 %v848, 16
    %v873 = vand.u32 %v843, 65535
    %v874 = vshrl.u32 %v843, 16
    %v875 = vmul.u32 %v871, %v873
    %v876 = vmul.u32 %v871, %v874
    %v877 = vmul.u32 %v872, %v873
    %v878 = vmul.u32 %v872, %v874
    %v879 = vshll.u32 %v876, 16
    %v880 = vshrl.u32 %v876, 16
    %v881 = vshll.u32 %v877, 16
    %v882 = vshrl.u32 %v877, 16
    %vm883 = vc.u32 %v875, %v879
    %v884 = vsel %vm883, 1, 0
    %v885 = vadd.s32 %v875, %v879
    %v886 = vadd.s32 %v878, %v884
    %vm887 = vc.u32 %v885, %v881
    %v888 = vsel %vm887, 1, 0
    %v889 = vadd.s32 %v885, %v881
    %v890 = vadd.s32 %v886, %v888
    %v891 = vadd.s32 %v890, %v880
    %v892 = vadd.s32 %v891, %v882
    %v893 = vmul.u32 %v848, %v839
    %v894 = vadd.s32 %v870, %v889
    %vm895 = vc.u32 %v870, %v889
    %v896 = vadd.s32 %v892, 1
    %v897 = vsel %vm895, %v896, %v892
    %v898 = vadd.s32 %v893, %v897
    %v899 = vadd.s32 %v898, 536870912
    %v900 = vshrl.u32 %v899, 30
    %v901 = vshll.u32 %v900, 30
    %v902 = vsub.s32 %v898, %v901
    %vm903 = vcmp.lt.s32.totalorder %v902, 0
    %v904 = vsub.s32 0, %v902
    %v905 = vsel %vm903, %v904, %v902
    %v906 = vclz %v905
    %v907 = vsub.s32 %v906, 2
    %vm908 = vcmp.gt.s32.totalorder 0, %v907
    %v909 = vsel %vm908, 0, %v907
    %v910 = vsub.s32 32, %v909
    %v911 = vshll.u32 %v902, %v909
    %v912 = vshrl.u32 %v894, %v910
    %v913 = vor.u32 %v911, %v912
    %v914 = vsub.s32 4294967266, %v909
    %v915 = vadd.s32 %v914, 127
    %v916 = vshll.u32 %v915, 23
    %v917 = vor.u32 4788187, %v916
    %v918 = vand.u32 2147483647, %v917
    %v920 = vcvt.s32.f32 %v913
    %v921 = vmul.f32 %v920, %v918
    %v922 = vxor.u32 %v921, 2147483648
    %v923 = vsel %vm802, %v922, %v921
    %v924 = vsub.s32 4, %v900
    %v925 = vsel %vm802, %v924, %v900
    %v926 = vsel %vm801, %v798, %v923
    %v927 = vsel %vm801, 0, %v925
    %v928 = vmul.f32 %v926, %v926
    %v929 = vmul.f32 %v928, -0.001358992
    %v930 = vadd.f32 %v929, 0.041655596
    %v931 = vmul.f32 %v928, %v930
    %v932 = vadd.f32 %v931, -0.4999988
    %v933 = vmul.f32 %v928, %v932
    %v934 = vadd.f32 1.0, %v933
    %v935 = vmul.f32 %v926, %v926
    %v936 = vmul.f32 %v935, -0.00019511016
    %v937 = vadd.f32 %v936, 0.008332121
    %v938 = vmul.f32 %v935, %v937
    %v939 = vadd.f32 %v938, -0.16666654
    %v940 = vmul.f32 %v935, %v939
    %v941 = vadd.f32 %v940, 1.0
    %v942 = vmul.f32 %v941, %v926
    %vm943 = vweird.f32 %v798
    %v944 = vadd.s32 %v927, 3
    %v945 = vand.u32 %v944, 3
    %vm946 = vcmp.lt.s32.totalorder %v945, 2
    %vm947 = vcmp.eq.s32.totalorder %v945, 0
    %v948 = vxor.u32 %v942, 2147483648
    %v949 = vsel %vm947, %v934, %v948
    %vm950 = vcmp.eq.s32.totalorder %v945, 2
    %v951 = vxor.u32 %v934, 2147483648
    %v952 = vsel %vm950, %v951, %v942
    %v953 = vsel %vm946, %v949, %v952
    %v954 = vsel %vm943, nan, %v953
    %v955 = vand.u32 2147483647, %v799
    %vm956 = vcmp.le.f32.partialorder %v955, 0.7853982
    %vm957 = vcmp.lt.s32.totalorder %v799, 0
    %v958 = vand.u32 %v799, 2139095040
    %v959 = vshrl.u32 %v958, 23
    %v960 = vsub.s32 %v959, 127
    %v961 = vand.u32 2147483647, %v799
    %v962 = vand.u32 %v961, 8388607
    %v963 = vor.u32 %v962, 8388608
    %v964 = vsub.s32 0, %v963
    %v965 = vadd.s32 %v960, 1
    %vm966 = vcmp.gt.s32.totalorder %v965, 0
    %v967 = vsel %vm966, %v965, 0
    %v968 = vshrl.u32 %v967, 5
    %v969 = vand.u32 %v967, 31
    %v970 = vsub.s32 32, %v969
    %v971 = vshrl.u32 683565275, %v970
    %v972 = vshll.u32 683565275, %v969
    %v973 = vshrl.u32 2475754826, %v970
    %v974 = vor.u32 %v972, %v973
    %v975 = vshll.u32 2475754826, %v969
    %v976 = vshrl.u32 2131351028, %v970
    %v977 = vor.u32 %v975, %v976
    %v978 = vshll.u32 2131351028, %v969
    %v979 = vshrl.u32 2102212464, %v970
    %v980 = vor.u32 %v978, %v979
    %v981 = vshll.u32 2102212464, %v969
    %v982 = vshrl.u32 920167782, %v970
    %v983 = vor.u32 %v981, %v982
    %v984 = vshll.u32 920167782, %v969
    %v985 = vshrl.u32 1326507024, %v970
    %v986 = vor.u32 %v984, %v985
    %vm987 = vcmp.lt.s32.totalorder %v968, 1
    %vm988 = vcmp.lt.s32.totalorder %v968, 2
    %vm989 = vcmp.lt.s32.totalorder %v968, 3
    %vm990 = vcmp.lt.s32.totalorder %v968, 4
    %v991 = vsel %vm987, %v971, %v974
    %v992 = vsel %vm990, %v980, 2102212464
    %v993 = vsel %vm989, %v977, %v992
    %v994 = vsel %vm988, %v991, %v993
    %v995 = vsel %vm987, %v974, %v977
    %v996 = vsel %vm990, %v983, 920167782
    %v997 = vsel %vm989, %v980, %v996
    %v998 = vsel %vm988, %v995, %v997
    %v999 = vsel %vm987, %v977, %v980
    %v1000 = vsel %vm990, %v986, 1326507024
    %v1001 = vsel %vm989, %v983, %v1000
    %v1002 = vsel %vm988, %v999, %v1001
    %v1003 = vshll.u32 %v963, 8
    %v1004 = vand.u32 %v1003, 65535
    %v1005 = vshrl.u32 %v1003, 16
    %v1006 = vand.u32 %v1002, 65535
    %v1007 = vshrl.u32 %v1002, 16
    %v1008 = vmul.u32 %v1004, %v1006
    %v1009 = vmul.u32 %v1004, %v1007
    %v1010 = vmul.u32 %v1005, %v1006
    %v1011 = vmul.u32 %v1005, %v1007
    %v1012 = vshll.u32 %v1009, 16
    %v1013 = vshrl.u32 %v1009, 16
    %v1014 = vshll.u32 %v1010, 16
    %v1015 = vshrl.u32 %v1010, 16
    %vm1016 = vc.u32 %v1008, %v1012
    %v1017 = vsel %vm1016, 1, 0
    %v1018 = vadd.s32 %v1008, %v1012
    %v1019 = vadd.s32 %v1011, %v1017
    %vm1020 = vc.u32 %v1018, %v1014
    %v1021 = vsel %vm1020, 1, 0
    %v1022 = vadd.s32 %v1018, %v1014
    %v1023 = vadd.s32 %v1019, %v1021
    %v1024 = vadd.s32 %v1023, %v1013
    %v1025 = vadd.s32 %v1024, %v1015
    %v1026 = vand.u32 %v1003, 65535
    %v1027 = vshrl.u32 %v1003, 16
    %v1028 = vand.u32 %v998, 65535
    %v1029 = vshrl.u32 %v998, 16
    %v1030 = vmul.u32 %v1026, %v1028
    %v1031 = vmul.u32 %v1026, %v1029
    %v1032 = vmul.u32 %v1027, %v1028
    %v1033 = vmul.u32 %v1027, %v1029
    %v1034 = vshll.u32 %v1031, 16
    %v1035 = vshrl.u32 %v1031, 16
    %v1036 = vshll.u32 %v1032, 16
    %v1037 = vshrl.u32 %v1032, 16
    %vm1038 = vc.u32 %v1030, %v1034
    %v1039 = vsel %vm1038, 1, 0
    %v1040 = vadd.s32 %v1030, %v1034
    %v1041 = vadd.s32 %v1033, %v1039
    %vm1042 = vc.u32 %v1040, %v1036
    %v1043 = vsel %vm1042, 1, 0
    %v1044 = vadd.s32 %v1040, %v1036
    %v1045 = vadd.s32 %v1041, %v1043
    %v1046 = vadd.s32 %v1045, %v1035
    %v1047 = vadd.s32 %v1046, %v1037
    %v1048 = vmul.u32 %v1003, %v994
    %v1049 = vadd.s32 %v1025, %v1044
    %vm1050 = vc.u32 %v1025, %v1044
    %v1051 = vadd.s32 %v1047, 1
    %v1052 = vsel %vm1050, %v1051, %v1047
    %v1053 = vadd.s32 %v1048, %v1052
    %v1054 = vadd.s32 %v1053, 536870912
    %v1055 = vshrl.u32 %v1054, 30
    %v1056 = vshll.u32 %v1055, 30
    %v1057 = vsub.s32 %v1053, %v1056
    %vm1058 = vcmp.lt.s32.totalorder %v1057, 0
    %v1059 = vsub.s32 0, %v1057
    %v1060 = vsel %vm1058, %v1059, %v1057
    %v1061 = vclz %v1060
    %v1062 = vsub.s32 %v1061, 2
    %vm1063 = vcmp.gt.s32.totalorder 0, %v1062
    %v1064 = vsel %vm1063, 0, %v1062
    %v1065 = vsub.s32 32, %v1064
    %v1066 = vshll.u32 %v1057, %v1064
    %v1067 = vshrl.u32 %v1049, %v1065
    %v1068 = vor.u32 %v1066, %v1067
    %v1069 = vsub.s32 4294967266, %v1064
    %v1070 = vadd.s32 %v1069, 127
    %v1071 = vshll.u32 %v1070, 23
    %v1072 = vor.u32 4788187, %v1071
    %v1073 = vand.u32 2147483647, %v1072
    %v1075 = vcvt.s32.f32 %v1068
    %v1076 = vmul.f32 %v1075, %v1073
    %v1077 = vxor.u32 %v1076, 2147483648
    %v1078 = vsel %vm957, %v1077, %v1076
    %v1079 = vsub.s32 4, %v1055
    %v1080 = vsel %vm957, %v1079, %v1055
    %v1081 = vsel %vm956, %v799, %v1078
    %v1082 = vsel %vm956, 0, %v1080
    %v1083 = vmul.f32 %v1081, %v1081
    %v1084 = vmul.f32 %v1083, -0.001358992
    %v1085 = vadd.f32 %v1084, 0.041655596
    %v1086 = vmul.f32 %v1083, %v1085
    %v1087 = vadd.f32 %v1086, -0.4999988
    %v1088 = vmul.f32 %v1083, %v1087
    %v1089 = vadd.f32 1.0, %v1088
    %v1090 = vmul.f32 %v1081, %v1081
    %v1091 = vmul.f32 %v1090, -0.00019511016
    %v1092 = vadd.f32 %v1091, 0.008332121
    %v1093 = vmul.f32 %v1090, %v1092
    %v1094 = vadd.f32 %v1093, -0.16666654
    %v1095 = vmul.f32 %v1090, %v1094
    %v1096 = vadd.f32 %v1095, 1.0
    %v1097 = vmul.f32 %v1096, %v1081
    %vm1098 = vweird.f32 %v799
    %v1099 = vadd.s32 %v1082, 3
    %v1100 = vand.u32 %v1099, 3
    %vm1101 = vcmp.lt.s32.totalorder %v1100, 2
    %vm1102 = vcmp.eq.s32.totalorder %v1100, 0
    %v1103 = vxor.u32 %v1097, 2147483648
    %v1104 = vsel %vm1102, %v1089, %v1103
    %vm1105 = vcmp.eq.s32.totalorder %v1100, 2
    %v1106 = vxor.u32 %v1089, 2147483648
    %v1107 = vsel %vm1105, %v1106, %v1097
    %v1108 = vsel %vm1101, %v1104, %v1107
    %v1109 = vsel %vm1098, nan, %v1108
    %s1110 = scalar_lea.vmem [#allocation3], 256
    %v1111 = vld [vmem:[%s1110] sm:$0xff]
    %v1112 = vld [vmem:[%s1110 + $0x8] sm:$0xff]
    %v1113 = vld [vmem:[%s1110 + $0x10] sm:$0xff]
    %v1114 = vld [vmem:[%s1110 + $0x18] sm:$0xff]
    %v1115 = vld [vmem:[%s1110 + $0x20] sm:$0xff]
    %v1116 = vld [vmem:[%s1110 + $0x28] sm:$0xff]
    %v1117 = vld [vmem:[%s1110 + $0x30] sm:$0xff]
    %v1118 = vld [vmem:[%s1110 + $0x38] sm:$0xff]
    %v1119 = vld [vmem:[%s1110 + $0x40] sm:$0xff]
    %v1120 = vld [vmem:[%s1110 + $0x48] sm:$0xff]
    %v1121 = vld [vmem:[%s1110 + $0x50] sm:$0xff]
    %v1122 = vld [vmem:[%s1110 + $0x58] sm:$0xff]
    %v1123 = vld [vmem:[%s1110 + $0x60] sm:$0xff]
    %v1124 = vld [vmem:[%s1110 + $0x68] sm:$0xff]
    %v1125 = vld [vmem:[%s1110 + $0x70] sm:$0xff]
    %v1126 = vld [vmem:[%s1110 + $0x78] sm:$0xff]
    %s1127 = scalar_lea.vmem %s5, 2
    %v1128 = vld [vmem:[%s1127] sm:$0x1]
    %v1130 = vperm.slane %v1128, 0
    %1132 = vmatpush.msra.mxu0 %v1126
    %1133 = vmatpush.msra.mxu0 %v1125
    %1134 = vmatpush.msra.mxu0 %v1124
    %1135 = vmatpush.msra.mxu0 %v1123
    %1136 = vmatpush.msra.mxu0 %v1122
    %1137 = vmatpush.msra.mxu0 %v1121
    %1138 = vmatpush.msra.mxu0 %v1120
    %1139 = vmatpush.msra.mxu0 %v1119
    %1140 = vmatpush.msra.mxu0 %v1118
    %1141 = vmatpush.msra.mxu0 %v1117
    %1142 = vmatpush.msra.mxu0 %v1116
    %1143 = vmatpush.msra.mxu0 %v1115
    %1144 = vmatpush.msra.mxu0 %v1114
    %1145 = vmatpush.msra.mxu0 %v1113
    %1146 = vmatpush.msra.mxu0 %v1112
    %1147 = vmatpush.msra.mxu0 %v1111
    %1148 = vmatmul.f32.gmra.mxu0 %v954
    %v1149 = vpop.f32.mrf.mxu0
    %v1150 = vadd.f32 %v1130, %v1149
    %1151 = vmatmul.f32.gmra.mxu0 %v1109
    %v1152 = vpop.f32.mrf.mxu0
    %v1153 = vadd.f32 %v1130, %v1152
    %1154 = vdwg.mxu0
    %v1155 = vmul.f32 %v85, %v1150
    %v1156 = vmul.f32 %v85, %v1153
    %v1157 = vand.u32 2147483647, %v1155
    %vm1158 = vcmp.le.f32.partialorder %v1157, 0.7853982
    %vm1159 = vcmp.lt.s32.totalorder %v1155, 0
    %v1160 = vand.u32 %v1155, 2139095040
    %v1161 = vshrl.u32 %v1160, 23
    %v1162 = vsub.s32 %v1161, 127
    %v1163 = vand.u32 2147483647, %v1155
    %v1164 = vand.u32 %v1163, 8388607
    %v1165 = vor.u32 %v1164, 8388608
    %v1166 = vsub.s32 0, %v1165
    %v1167 = vadd.s32 %v1162, 1
    %vm1168 = vcmp.gt.s32.totalorder %v1167, 0
    %v1169 = vsel %vm1168, %v1167, 0
    %v1170 = vshrl.u32 %v1169, 5
    %v1171 = vand.u32 %v1169, 31
    %v1172 = vsub.s32 32, %v1171
    %v1173 = vshrl.u32 683565275, %v1172
    %v1174 = vshll.u32 683565275, %v1171
    %v1175 = vshrl.u32 2475754826, %v1172
    %v1176 = vor.u32 %v1174, %v1175
    %v1177 = vshll.u32 2475754826, %v1171
    %v1178 = vshrl.u32 2131351028, %v1172
    %v1179 = vor.u32 %v1177, %v1178
    %v1180 = vshll.u32 2131351028, %v1171
    %v1181 = vshrl.u32 2102212464, %v1172
    %v1182 = vor.u32 %v1180, %v1181
    %v1183 = vshll.u32 2102212464, %v1171
    %v1184 = vshrl.u32 920167782, %v1172
    %v1185 = vor.u32 %v1183, %v1184
    %v1186 = vshll.u32 920167782, %v1171
    %v1187 = vshrl.u32 1326507024, %v1172
    %v1188 = vor.u32 %v1186, %v1187
    %vm1189 = vcmp.lt.s32.totalorder %v1170, 1
    %vm1190 = vcmp.lt.s32.totalorder %v1170, 2
    %vm1191 = vcmp.lt.s32.totalorder %v1170, 3
    %vm1192 = vcmp.lt.s32.totalorder %v1170, 4
    %v1193 = vsel %vm1189, %v1173, %v1176
    %v1194 = vsel %vm1192, %v1182, 2102212464
    %v1195 = vsel %vm1191, %v1179, %v1194
    %v1196 = vsel %vm1190, %v1193, %v1195
    %v1197 = vsel %vm1189, %v1176, %v1179
    %v1198 = vsel %vm1192, %v1185, 920167782
    %v1199 = vsel %vm1191, %v1182, %v1198
    %v1200 = vsel %vm1190, %v1197, %v1199
    %v1201 = vsel %vm1189, %v1179, %v1182
    %v1202 = vsel %vm1192, %v1188, 1326507024
    %v1203 = vsel %vm1191, %v1185, %v1202
    %v1204 = vsel %vm1190, %v1201, %v1203
    %v1205 = vshll.u32 %v1165, 8
    %v1206 = vand.u32 %v1205, 65535
    %v1207 = vshrl.u32 %v1205, 16
    %v1208 = vand.u32 %v1204, 65535
    %v1209 = vshrl.u32 %v1204, 16
    %v1210 = vmul.u32 %v1206, %v1208
    %v1211 = vmul.u32 %v1206, %v1209
    %v1212 = vmul.u32 %v1207, %v1208
    %v1213 = vmul.u32 %v1207, %v1209
    %v1214 = vshll.u32 %v1211, 16
    %v1215 = vshrl.u32 %v1211, 16
    %v1216 = vshll.u32 %v1212, 16
    %v1217 = vshrl.u32 %v1212, 16
    %vm1218 = vc.u32 %v1210, %v1214
    %v1219 = vsel %vm1218, 1, 0
    %v1220 = vadd.s32 %v1210, %v1214
    %v1221 = vadd.s32 %v1213, %v1219
    %vm1222 = vc.u32 %v1220, %v1216
    %v1223 = vsel %vm1222, 1, 0
    %v1224 = vadd.s32 %v1220, %v1216
    %v1225 = vadd.s32 %v1221, %v1223
    %v1226 = vadd.s32 %v1225, %v1215
    %v1227 = vadd.s32 %v1226, %v1217
    %v1228 = vand.u32 %v1205, 65535
    %v1229 = vshrl.u32 %v1205, 16
    %v1230 = vand.u32 %v1200, 65535
    %v1231 = vshrl.u32 %v1200, 16
    %v1232 = vmul.u32 %v1228, %v1230
    %v1233 = vmul.u32 %v1228, %v1231
    %v1234 = vmul.u32 %v1229, %v1230
    %v1235 = vmul.u32 %v1229, %v1231
    %v1236 = vshll.u32 %v1233, 16
    %v1237 = vshrl.u32 %v1233, 16
    %v1238 = vshll.u32 %v1234, 16
    %v1239 = vshrl.u32 %v1234, 16
    %vm1240 = vc.u32 %v1232, %v1236
    %v1241 = vsel %vm1240, 1, 0
    %v1242 = vadd.s32 %v1232, %v1236
    %v1243 = vadd.s32 %v1235, %v1241
    %vm1244 = vc.u32 %v1242, %v1238
    %v1245 = vsel %vm1244, 1, 0
    %v1246 = vadd.s32 %v1242, %v1238
    %v1247 = vadd.s32 %v1243, %v1245
    %v1248 = vadd.s32 %v1247, %v1237
    %v1249 = vadd.s32 %v1248, %v1239
    %v1250 = vmul.u32 %v1205, %v1196
    %v1251 = vadd.s32 %v1227, %v1246
    %vm1252 = vc.u32 %v1227, %v1246
    %v1253 = vadd.s32 %v1249, 1
    %v1254 = vsel %vm1252, %v1253, %v1249
    %v1255 = vadd.s32 %v1250, %v1254
    %v1256 = vadd.s32 %v1255, 536870912
    %v1257 = vshrl.u32 %v1256, 30
    %v1258 = vshll.u32 %v1257, 30
    %v1259 = vsub.s32 %v1255, %v1258
    %vm1260 = vcmp.lt.s32.totalorder %v1259, 0
    %v1261 = vsub.s32 0, %v1259
    %v1262 = vsel %vm1260, %v1261, %v1259
    %v1263 = vclz %v1262
    %v1264 = vsub.s32 %v1263, 2
    %vm1265 = vcmp.gt.s32.totalorder 0, %v1264
    %v1266 = vsel %vm1265, 0, %v1264
    %v1267 = vsub.s32 32, %v1266
    %v1268 = vshll.u32 %v1259, %v1266
    %v1269 = vshrl.u32 %v1251, %v1267
    %v1270 = vor.u32 %v1268, %v1269
    %v1271 = vsub.s32 4294967266, %v1266
    %v1272 = vadd.s32 %v1271, 127
    %v1273 = vshll.u32 %v1272, 23
    %v1274 = vor.u32 4788187, %v1273
    %v1275 = vand.u32 2147483647, %v1274
    %v1277 = vcvt.s32.f32 %v1270
    %v1278 = vmul.f32 %v1277, %v1275
    %v1279 = vxor.u32 %v1278, 2147483648
    %v1280 = vsel %vm1159, %v1279, %v1278
    %v1281 = vsub.s32 4, %v1257
    %v1282 = vsel %vm1159, %v1281, %v1257
    %v1283 = vsel %vm1158, %v1155, %v1280
    %v1284 = vsel %vm1158, 0, %v1282
    %v1285 = vmul.f32 %v1283, %v1283
    %v1286 = vmul.f32 %v1285, -0.001358992
    %v1287 = vadd.f32 %v1286, 0.041655596
    %v1288 = vmul.f32 %v1285, %v1287
    %v1289 = vadd.f32 %v1288, -0.4999988
    %v1290 = vmul.f32 %v1285, %v1289
    %v1291 = vadd.f32 1.0, %v1290
    %v1292 = vmul.f32 %v1283, %v1283
    %v1293 = vmul.f32 %v1292, -0.00019511016
    %v1294 = vadd.f32 %v1293, 0.008332121
    %v1295 = vmul.f32 %v1292, %v1294
    %v1296 = vadd.f32 %v1295, -0.16666654
    %v1297 = vmul.f32 %v1292, %v1296
    %v1298 = vadd.f32 %v1297, 1.0
    %v1299 = vmul.f32 %v1298, %v1283
    %vm1300 = vweird.f32 %v1155
    %v1301 = vadd.s32 %v1284, 3
    %v1302 = vand.u32 %v1301, 3
    %vm1303 = vcmp.lt.s32.totalorder %v1302, 2
    %vm1304 = vcmp.eq.s32.totalorder %v1302, 0
    %v1305 = vxor.u32 %v1299, 2147483648
    %v1306 = vsel %vm1304, %v1291, %v1305
    %vm1307 = vcmp.eq.s32.totalorder %v1302, 2
    %v1308 = vxor.u32 %v1291, 2147483648
    %v1309 = vsel %vm1307, %v1308, %v1299
    %v1310 = vsel %vm1303, %v1306, %v1309
    %v1311 = vsel %vm1300, nan, %v1310
    %v1312 = vand.u32 2147483647, %v1156
    %vm1313 = vcmp.le.f32.partialorder %v1312, 0.7853982
    %vm1314 = vcmp.lt.s32.totalorder %v1156, 0
    %v1315 = vand.u32 %v1156, 2139095040
    %v1316 = vshrl.u32 %v1315, 23
    %v1317 = vsub.s32 %v1316, 127
    %v1318 = vand.u32 2147483647, %v1156
    %v1319 = vand.u32 %v1318, 8388607
    %v1320 = vor.u32 %v1319, 8388608
    %v1321 = vsub.s32 0, %v1320
    %v1322 = vadd.s32 %v1317, 1
    %vm1323 = vcmp.gt.s32.totalorder %v1322, 0
    %v1324 = vsel %vm1323, %v1322, 0
    %v1325 = vshrl.u32 %v1324, 5
    %v1326 = vand.u32 %v1324, 31
    %v1327 = vsub.s32 32, %v1326
    %v1328 = vshrl.u32 683565275, %v1327
    %v1329 = vshll.u32 683565275, %v1326
    %v1330 = vshrl.u32 2475754826, %v1327
    %v1331 = vor.u32 %v1329, %v1330
    %v1332 = vshll.u32 2475754826, %v1326
    %v1333 = vshrl.u32 2131351028, %v1327
    %v1334 = vor.u32 %v1332, %v1333
    %v1335 = vshll.u32 2131351028, %v1326
    %v1336 = vshrl.u32 2102212464, %v1327
    %v1337 = vor.u32 %v1335, %v1336
    %v1338 = vshll.u32 2102212464, %v1326
    %v1339 = vshrl.u32 920167782, %v1327
    %v1340 = vor.u32 %v1338, %v1339
    %v1341 = vshll.u32 920167782, %v1326
    %v1342 = vshrl.u32 1326507024, %v1327
    %v1343 = vor.u32 %v1341, %v1342
    %vm1344 = vcmp.lt.s32.totalorder %v1325, 1
    %vm1345 = vcmp.lt.s32.totalorder %v1325, 2
    %vm1346 = vcmp.lt.s32.totalorder %v1325, 3
    %vm1347 = vcmp.lt.s32.totalorder %v1325, 4
    %v1348 = vsel %vm1344, %v1328, %v1331
    %v1349 = vsel %vm1347, %v1337, 2102212464
    %v1350 = vsel %vm1346, %v1334, %v1349
    %v1351 = vsel %vm1345, %v1348, %v1350
    %v1352 = vsel %vm1344, %v1331, %v1334
    %v1353 = vsel %vm1347, %v1340, 920167782
    %v1354 = vsel %vm1346, %v1337, %v1353
    %v1355 = vsel %vm1345, %v1352, %v1354
    %v1356 = vsel %vm1344, %v1334, %v1337
    %v1357 = vsel %vm1347, %v1343, 1326507024
    %v1358 = vsel %vm1346, %v1340, %v1357
    %v1359 = vsel %vm1345, %v1356, %v1358
    %v1360 = vshll.u32 %v1320, 8
    %v1361 = vand.u32 %v1360, 65535
    %v1362 = vshrl.u32 %v1360, 16
    %v1363 = vand.u32 %v1359, 65535
    %v1364 = vshrl.u32 %v1359, 16
    %v1365 = vmul.u32 %v1361, %v1363
    %v1366 = vmul.u32 %v1361, %v1364
    %v1367 = vmul.u32 %v1362, %v1363
    %v1368 = vmul.u32 %v1362, %v1364
    %v1369 = vshll.u32 %v1366, 16
    %v1370 = vshrl.u32 %v1366, 16
    %v1371 = vshll.u32 %v1367, 16
    %v1372 = vshrl.u32 %v1367, 16
    %vm1373 = vc.u32 %v1365, %v1369
    %v1374 = vsel %vm1373, 1, 0
    %v1375 = vadd.s32 %v1365, %v1369
    %v1376 = vadd.s32 %v1368, %v1374
    %vm1377 = vc.u32 %v1375, %v1371
    %v1378 = vsel %vm1377, 1, 0
    %v1379 = vadd.s32 %v1375, %v1371
    %v1380 = vadd.s32 %v1376, %v1378
    %v1381 = vadd.s32 %v1380, %v1370
    %v1382 = vadd.s32 %v1381, %v1372
    %v1383 = vand.u32 %v1360, 65535
    %v1384 = vshrl.u32 %v1360, 16
    %v1385 = vand.u32 %v1355, 65535
    %v1386 = vshrl.u32 %v1355, 16
    %v1387 = vmul.u32 %v1383, %v1385
    %v1388 = vmul.u32 %v1383, %v1386
    %v1389 = vmul.u32 %v1384, %v1385
    %v1390 = vmul.u32 %v1384, %v1386
    %v1391 = vshll.u32 %v1388, 16
    %v1392 = vshrl.u32 %v1388, 16
    %v1393 = vshll.u32 %v1389, 16
    %v1394 = vshrl.u32 %v1389, 16
    %vm1395 = vc.u32 %v1387, %v1391
    %v1396 = vsel %vm1395, 1, 0
    %v1397 = vadd.s32 %v1387, %v1391
    %v1398 = vadd.s32 %v1390, %v1396
    %vm1399 = vc.u32 %v1397, %v1393
    %v1400 = vsel %vm1399, 1, 0
    %v1401 = vadd.s32 %v1397, %v1393
    %v1402 = vadd.s32 %v1398, %v1400
    %v1403 = vadd.s32 %v1402, %v1392
    %v1404 = vadd.s32 %v1403, %v1394
    %v1405 = vmul.u32 %v1360, %v1351
    %v1406 = vadd.s32 %v1382, %v1401
    %vm1407 = vc.u32 %v1382, %v1401
    %v1408 = vadd.s32 %v1404, 1
    %v1409 = vsel %vm1407, %v1408, %v1404
    %v1410 = vadd.s32 %v1405, %v1409
    %v1411 = vadd.s32 %v1410, 536870912
    %v1412 = vshrl.u32 %v1411, 30
    %v1413 = vshll.u32 %v1412, 30
    %v1414 = vsub.s32 %v1410, %v1413
    %vm1415 = vcmp.lt.s32.totalorder %v1414, 0
    %v1416 = vsub.s32 0, %v1414
    %v1417 = vsel %vm1415, %v1416, %v1414
    %v1418 = vclz %v1417
    %v1419 = vsub.s32 %v1418, 2
    %vm1420 = vcmp.gt.s32.totalorder 0, %v1419
    %v1421 = vsel %vm1420, 0, %v1419
    %v1422 = vsub.s32 32, %v1421
    %v1423 = vshll.u32 %v1414, %v1421
    %v1424 = vshrl.u32 %v1406, %v1422
    %v1425 = vor.u32 %v1423, %v1424
    %v1426 = vsub.s32 4294967266, %v1421
    %v1427 = vadd.s32 %v1426, 127
    %v1428 = vshll.u32 %v1427, 23
    %v1429 = vor.u32 4788187, %v1428
    %v1430 = vand.u32 2147483647, %v1429
    %v1432 = vcvt.s32.f32 %v1425
    %v1433 = vmul.f32 %v1432, %v1430
    %v1434 = vxor.u32 %v1433, 2147483648
    %v1435 = vsel %vm1314, %v1434, %v1433
    %v1436 = vsub.s32 4, %v1412
    %v1437 = vsel %vm1314, %v1436, %v1412
    %v1438 = vsel %vm1313, %v1156, %v1435
    %v1439 = vsel %vm1313, 0, %v1437
    %v1440 = vmul.f32 %v1438, %v1438
    %v1441 = vmul.f32 %v1440, -0.001358992
    %v1442 = vadd.f32 %v1441, 0.041655596
    %v1443 = vmul.f32 %v1440, %v1442
    %v1444 = vadd.f32 %v1443, -0.4999988
    %v1445 = vmul.f32 %v1440, %v1444
    %v1446 = vadd.f32 1.0, %v1445
    %v1447 = vmul.f32 %v1438, %v1438
    %v1448 = vmul.f32 %v1447, -0.00019511016
    %v1449 = vadd.f32 %v1448, 0.008332121
    %v1450 = vmul.f32 %v1447, %v1449
    %v1451 = vadd.f32 %v1450, -0.16666654
    %v1452 = vmul.f32 %v1447, %v1451
    %v1453 = vadd.f32 %v1452, 1.0
    %v1454 = vmul.f32 %v1453, %v1438
    %vm1455 = vweird.f32 %v1156
    %v1456 = vadd.s32 %v1439, 3
    %v1457 = vand.u32 %v1456, 3
    %vm1458 = vcmp.lt.s32.totalorder %v1457, 2
    %vm1459 = vcmp.eq.s32.totalorder %v1457, 0
    %v1460 = vxor.u32 %v1454, 2147483648
    %v1461 = vsel %vm1459, %v1446, %v1460
    %vm1462 = vcmp.eq.s32.totalorder %v1457, 2
    %v1463 = vxor.u32 %v1446, 2147483648
    %v1464 = vsel %vm1462, %v1463, %v1454
    %v1465 = vsel %vm1458, %v1461, %v1464
    %v1466 = vsel %vm1455, nan, %v1465
    %v1467 = vld [vmem:[%s6] sm:$0xff]
    %v1468 = vld [vmem:[%s6 + $0x8] sm:$0xff]
    %v1469 = vld [vmem:[%s6 + $0x10] sm:$0xff]
    %v1470 = vld [vmem:[%s6 + $0x18] sm:$0xff]
    %v1471 = vld [vmem:[%s6 + $0x20] sm:$0xff]
    %v1472 = vld [vmem:[%s6 + $0x28] sm:$0xff]
    %v1473 = vld [vmem:[%s6 + $0x30] sm:$0xff]
    %v1474 = vld [vmem:[%s6 + $0x38] sm:$0xff]
    %v1475 = vld [vmem:[%s6 + $0x40] sm:$0xff]
    %v1476 = vld [vmem:[%s6 + $0x48] sm:$0xff]
    %v1477 = vld [vmem:[%s6 + $0x50] sm:$0xff]
    %v1478 = vld [vmem:[%s6 + $0x58] sm:$0xff]
    %v1479 = vld [vmem:[%s6 + $0x60] sm:$0xff]
    %v1480 = vld [vmem:[%s6 + $0x68] sm:$0xff]
    %v1481 = vld [vmem:[%s6 + $0x70] sm:$0xff]
    %v1482 = vld [vmem:[%s6 + $0x78] sm:$0xff]
    %v1483 = vld [vmem:[%s7] sm:$0x1]
    %v1485 = vperm.slane %v1483, 0
    %1487 = vmatpush.msra.mxu0 %v1482
    %1488 = vmatpush.msra.mxu0 %v1481
    %1489 = vmatpush.msra.mxu0 %v1480
    %1490 = vmatpush.msra.mxu0 %v1479
    %1491 = vmatpush.msra.mxu0 %v1478
    %1492 = vmatpush.msra.mxu0 %v1477
    %1493 = vmatpush.msra.mxu0 %v1476
    %1494 = vmatpush.msra.mxu0 %v1475
    %1495 = vmatpush.msra.mxu0 %v1474
    %1496 = vmatpush.msra.mxu0 %v1473
    %1497 = vmatpush.msra.mxu0 %v1472
    %1498 = vmatpush.msra.mxu0 %v1471
    %1499 = vmatpush.msra.mxu0 %v1470
    %1500 = vmatpush.msra.mxu0 %v1469
    %1501 = vmatpush.msra.mxu0 %v1468
    %1502 = vmatpush.msra.mxu0 %v1467
    %1503 = vmatmul.f32.gmra.mxu0 %v1311
    %v1504 = vpop.f32.mrf.mxu0
    %v1505 = vadd.f32 %v1485, %v1504
    %1506 = vmatmul.f32.gmra.mxu0 %v1466
    %v1507 = vpop.f32.mrf.mxu0
    %v1508 = vadd.f32 %v1485, %v1507
    %1509 = vdwg.mxu0
    %v1510 = vlaneseq
    %v1511 = vand.u32 %v1510, 127
    %vm1512 = vcmp.ge.s32.totalorder %v1511, 1
    %1513 = vset.pattern.permute.xlu0 2
    %1514 = vperm.xlu0 %1513, %v49
    %v1515 = vpop.permute.xlu0 %1514
    %1517 = vset.pattern.permute.xlu0 2
    %1518 = vperm.xlu0 %1517, %v50
    %v1519 = vpop.permute.xlu0 %1518
    %v1521 = vsel %vm1512, %v1515, 0.0
    %v1522 = vsel %vm1512, %v1519, 0.0
    %v1523 = vsub.f32 %v1505, %v1521
    %v1524 = vsub.f32 %v1508, %v1522
    %vm1525 = vcmask 15360
    %1526 = vst.msk [vmem:[%s8] sm:$0xff] %vm1525, %v1523
    %1527 = vst.msk [vmem:[%s8 + $0x8] sm:$0xff] %vm1525, %v1524
    // Predicated region
    $region38: #{tpu_custom_call.1} parent=1 // pred_check
      _
    $region39: #{tpu_custom_call.1} parent=1 // pred_check_branch
      %1529 = sbr.rel (0) target = $region41
    $region40: #{tpu_custom_call.1} parent=1 // pred_region
      _
    $region41: #{tpu_custom_call.1} parent=1 // pred_fallthru
      _
    // Predicated region
    $region42: #{tpu_custom_call.1} parent=1 // pred_check
      _
    $region43: #{tpu_custom_call.1} parent=1 // pred_check_branch
      %1531 = sbr.rel (0) target = $region45
    $region44: #{tpu_custom_call.1} parent=1 // pred_region
      _
    $region45: #{tpu_custom_call.1} parent=1 // pred_fallthru
      _
    %1532 = vsyncpa [#allocation4], 1

</llo_original>
